<compile_context>
chip_gen: v7x
topology: tpu7x:2x2x1
jax: 0.10.0
libtpu: 0.0.40
codegen_flags: <defaults>
</compile_context>

<pallas_src>
import functools

import jax
import jax.numpy as jnp
from jax import lax
from jax.experimental import pallas as pl
from jax.experimental.pallas import tpu as pltpu


LANE = 128  # one vreg lane-width; the whole stacked hidden state lives in one row


def gru_regressor_kernel(x_ref, w_ih0_ref, b_ih0_ref, wpack_ref, bpack_ref,
                         w_lin_ref, b_lin_ref, out_ref, gi_ref,
                         *, num_layers, seq_len, hidden_size):
    """Single-invocation kernel (grid = ()), everything resident in VMEM.

    x_ref      : (Tp, P)     padded GRU input sequence (P = 128-padded input width)
    w_ih0_ref  : (P, 3G)     layer-0 input->hidden weights in compacted tiles r|z|n
    b_ih0_ref  : (1, 3G)
    wpack_ref  : (G, 4G)     packed recurrence weights, column tiles:
                             [ r_pre | z_pre | gi_n | gh_n ], each 128 wide with
                             layer l at lanes [l*H,(l+1)*H).  gi+gh for r/z of
                             layers l>=1 share the same columns (MXU does the add).
    bpack_ref  : (1, 4G)
    w_lin_ref  : (1, G)      final Linear weights at the top layer's lanes, 0 elsewhere
    b_lin_ref  : (1, 1)
    out_ref    : (1, 1)
    gi_ref     : (Tp, 3G)    VMEM scratch: layer-0 input-gate pre-activations
    """
    L, T, H, G = num_layers, seq_len, hidden_size, LANE

    # Layer-0 input->hidden pre-activations for ALL timesteps: one MXU matmul,
    # off the serial recurrence chain.
    gi_ref[...] = jnp.dot(x_ref[...], w_ih0_ref[...],
                          preferred_element_type=jnp.float32) + b_ih0_ref[...]

    wpack = wpack_ref[...]                                  # (G, 4G)
    bpack = bpack_ref[...]                                  # (1, 4G)
    lane = lax.broadcasted_iota(jnp.int32, (1, G), 1)       # hoisted once

    h = jnp.zeros((1, G), jnp.float32)                      # compacted stacked hidden
    acc = jnp.zeros((1, G), jnp.float32)                    # sum_t relu(h_t)

    # Skewed (wavefront) recurrence, fully unrolled: at step i, layer l handles
    # timestep t = i - l.  All layers' gate pre-activations for the step come
    # from ONE (1,128)@(128,512) matmul on the start-of-step hidden state.
    for i in range(T + L - 1):
        pre = jnp.dot(h, wpack,
                      preferred_element_type=jnp.float32) + bpack   # (1, 4G)

        # Layer-0 input-driven gate terms for timestep t = i (zero outside the
        # layer-0 lanes).  Clamp the row index in the wavefront tail; layer 0 is
        # frozen there, so the stale row is harmless.
        t0 = min(i, T - 1)
        gi0 = gi_ref[t0:t0 + 1, :]                                   # (1, 3G)

        # PyTorch GRU gate order r, z, n -- computed for ALL layers at once.
        r = jax.nn.sigmoid(pre[:, 0:G] + gi0[:, 0:G])
        z = jax.nn.sigmoid(pre[:, G:2 * G] + gi0[:, G:2 * G])
        n = jnp.tanh(pre[:, 2 * G:3 * G] + gi0[:, 2 * G:3 * G]
                     + r * pre[:, 3 * G:4 * G])
        cand = (1.0 - z) * n + z * h

        # Freeze layers inactive at this wavefront step (t = i - l outside
        # [0, T)).  Active layers form a contiguous lane range.
        lo = max(0, i - T + 1)
        hi = min(L - 1, i)
        if lo == 0 and hi == L - 1:
            # All layers active.  Padded lanes [L*H:G) stay 0: their wpack
            # columns / biases / gi0 are 0, so n=0, z=0.5 -> cand = 0.5*h = 0.
            h = cand
        else:
            active = (lane >= lo * H) & (lane < (hi + 1) * H)
            h = jnp.where(active, cand, h)

        # Top layer emits its output at steps L-1 .. T+L-2; accumulate relu(h).
        # Lower layers' lanes ride along but are zeroed by w_lin below.
        if i >= L - 1:
            acc = acc + jnp.maximum(h, 0.0)

    # ReLU -> Linear(H,1) -> sum over time: one VPU multiply + one lane reduce.
    out_ref[...] = (jnp.sum(acc * w_lin_ref[...], axis=1, keepdims=True)
                    + float(T) * b_lin_ref[...])


def make_params(key, input_size, hidden_size, num_layers):
    """Deterministic GRU + Linear parameters (PyTorch-style uniform init)."""
    H, L = hidden_size, num_layers
    D = input_size + 1
    bound = 1.0 / jnp.sqrt(jnp.float32(H))
    keys = iter(jax.random.split(key, 4 * L + 2))

    def u(k, shape):
        return jax.random.uniform(k, shape, jnp.float32, -bound, bound)

    raw_layers = []
    for layer in range(L):
        d_in = D if layer == 0 else H
        raw_layers.append(dict(
            w_ih=u(next(keys), (3 * H, d_in)),
            w_hh=u(next(keys), (3 * H, H)),
            b_ih=u(next(keys), (3 * H,)),
            b_hh=u(next(keys), (3 * H,)),
        ))
    w_lin = u(next(keys), (1, H))
    b_lin = u(next(keys), (1,))
    return raw_layers, w_lin, b_lin


def pack_params_for_kernel(raw_layers, w_lin, b_lin, input_size, hidden_size):
    """Lane-compact and pack the GRU/Linear weights for the kernel layout."""
    H = hidden_size
    L = len(raw_layers)
    D = input_size + 1
    G = LANE
    assert L * H <= G, "stacked hidden state must fit one 128-lane vreg row"
    P = ((D + G - 1) // G) * G                                # 128-padded input width

    def gate(w, g):   # (3H, d_in) -> transposed gate-g block (d_in, H)
        return w[g * H:(g + 1) * H, :].T

    def bgate(b, g):
        return b[g * H:(g + 1) * H]

    def cols(tile, l):
        return slice(tile * G + l * H, tile * G + (l + 1) * H)

    # Layer-0 input->hidden weights, mapped into compacted tiles r|z|n
    # (only layer-0 lanes [0:H) of each tile are nonzero).
    w_ih0 = jnp.zeros((P, 3 * G), jnp.float32)
    b_ih0 = jnp.zeros((1, 3 * G), jnp.float32)
    for g in range(3):
        w_ih0 = w_ih0.at[:D, g * G:g * G + H].set(gate(raw_layers[0]['w_ih'], g))
        b_ih0 = b_ih0.at[0, g * G:g * G + H].set(bgate(raw_layers[0]['b_ih'], g))

    # Packed per-wavefront-step recurrence weights.
    #   rows   : compacted hidden lanes (layer l at rows [l*H,(l+1)*H))
    #   columns: 4 lane-aligned tiles of width 128:
    #     tile 0: r pre-activation (gh_r for layer 0; gi_r+gh_r folded for l>=1)
    #     tile 1: z pre-activation (ditto)
    #     tile 2: gi_n             (zero for layer 0 -- comes from gi_ref)
    #     tile 3: gh_n
    wpack = jnp.zeros((G, 4 * G), jnp.float32)
    bpack = jnp.zeros((1, 4 * G), jnp.float32)
    for l in range(L):
        rows_self = slice(l * H, (l + 1) * H)                 # driven by h_l
        w_hh, b_hh = raw_layers[l]['w_hh'], raw_layers[l]['b_hh']
        wpack = wpack.at[rows_self, cols(0, l)].set(gate(w_hh, 0))   # gh_r
        wpack = wpack.at[rows_self, cols(1, l)].set(gate(w_hh, 1))   # gh_z
        wpack = wpack.at[rows_self, cols(3, l)].set(gate(w_hh, 2))   # gh_n
        bpack = bpack.at[0, cols(0, l)].add(bgate(b_hh, 0))
        bpack = bpack.at[0, cols(1, l)].add(bgate(b_hh, 1))
        bpack = bpack.at[0, cols(3, l)].add(bgate(b_hh, 2))
        if l > 0:
            rows_prev = slice((l - 1) * H, l * H)              # driven by h_{l-1}
            w_ih, b_ih = raw_layers[l]['w_ih'], raw_layers[l]['b_ih']
            wpack = wpack.at[rows_prev, cols(0, l)].set(gate(w_ih, 0))  # gi_r (folded)
            wpack = wpack.at[rows_prev, cols(1, l)].set(gate(w_ih, 1))  # gi_z (folded)
            wpack = wpack.at[rows_prev, cols(2, l)].set(gate(w_ih, 2))  # gi_n
            bpack = bpack.at[0, cols(0, l)].add(bgate(b_ih, 0))
            bpack = bpack.at[0, cols(1, l)].add(bgate(b_ih, 1))
            bpack = bpack.at[0, cols(2, l)].add(bgate(b_ih, 2))

    # Final Linear(H, 1) weights placed at the top layer's lanes, zeros elsewhere.
    w_lin_full = jnp.zeros((1, G), jnp.float32).at[0, (L - 1) * H:L * H].set(
        w_lin[0].astype(jnp.float32))
    b_lin_full = b_lin.reshape(1, 1).astype(jnp.float32)

    return dict(w_ih0=w_ih0, b_ih0=b_ih0, wpack=wpack, bpack=bpack,
                wlin=w_lin_full, blin=b_lin_full, P=P, G=G, H=H, L=L)


def stock_price_regressor(x1, x2, packed):
    """Forward pass. x1: (T, F) float32, x2: scalar. Returns a scalar."""
    T, F = x1.shape
    D = F + 1
    P, G, L, H = packed['P'], packed['G'], packed['L'], packed['H']
    T_pad = ((T + 7) // 8) * 8                                # sublane-align scratch

    x2_col = jnp.full((T, 1), x2, dtype=jnp.float32)          # x2.repeat(T).view(-1, 1)
    x = jnp.concatenate([x1.astype(jnp.float32), x2_col], axis=1)     # (T, D)
    x_pad = jnp.pad(x, ((0, T_pad - T), (0, P - D)))          # (T_pad, P)

    kernel = functools.partial(gru_regressor_kernel, num_layers=L, seq_len=T,
                               hidden_size=H)
    vmem = pl.BlockSpec(memory_space=pltpu.MemorySpace.VMEM)
    out = pl.pallas_call(
        kernel,
        out_shape=jax.ShapeDtypeStruct((1, 1), jnp.float32),
        in_specs=[vmem] * 7,
        out_specs=vmem,
        scratch_shapes=[
            pltpu.VMEM((T_pad, 3 * G), jnp.float32),  # layer-0 input-gate pre-acts
        ],
    )(x_pad, packed['w_ih0'], packed['b_ih0'], packed['wpack'], packed['bpack'],
      packed['wlin'], packed['blin'])
    return out[0, 0]


def reference_forward(x1, x2, raw_layers, w_lin, b_lin, hidden_size):
    """Pure-JAX reference matching torch semantics (for validation)."""
    H = hidden_size
    T = x1.shape[0]
    x = jnp.concatenate([x1, jnp.full((T, 1), x2, jnp.float32)], axis=1)
    inp = x
    for p in raw_layers:
        def cell(h, x_t, p=p):
            gi = p['w_ih'] @ x_t + p['b_ih']
            gh = p['w_hh'] @ h + p['b_hh']
            r = jax.nn.sigmoid(gi[:H] + gh[:H])
            z = jax.nn.sigmoid(gi[H:2 * H] + gh[H:2 * H])
            n = jnp.tanh(gi[2 * H:] + r * gh[2 * H:])
            h_new = (1.0 - z) * n + z * h
            return h_new, h_new
        _, hs = lax.scan(cell, jnp.zeros((H,), jnp.float32), inp)
        inp = hs
    act = jnp.maximum(inp, 0.0)
    w = act @ w_lin.T + b_lin                                 # (T, 1)
    return jnp.sum(w)


if __name__ == "__main__":
    cfg = dict(input_size=7, gru_hidden_size=32, gru_num_layers=2)
    T = 8                                                     # sequence length
    key = jax.random.PRNGKey(0)
    k_param, k_x1, k_x2 = jax.random.split(key, 3)

    raw_layers, w_lin, b_lin = make_params(
        k_param, cfg['input_size'], cfg['gru_hidden_size'], cfg['gru_num_layers'])
    packed = pack_params_for_kernel(
        raw_layers, w_lin, b_lin, cfg['input_size'], cfg['gru_hidden_size'])

    x1 = jax.random.normal(k_x1, (T, cfg['input_size']), jnp.float32)
    x2 = jax.random.normal(k_x2, (), jnp.float32)

    out = stock_price_regressor(x1, x2, packed)
    out = jax.block_until_ready(out)

    ref = reference_forward(x1, x2, raw_layers, w_lin, b_lin, cfg['gru_hidden_size'])
    ref = jax.block_until_ready(ref)

    assert out.shape == (), f"expected scalar, got {out.shape}"
    assert jnp.allclose(out, ref, atol=1e-4, rtol=1e-4), (out, ref)
    print("KERNEL_OK")
</pallas_src>

<mosaic_0001>
module attributes {stable_mosaic.version = 11 : i64} {
  func.func @gru_regressor_kernel(%arg0: memref<8x128xf32, #tpu.memory_space<vmem>>, %arg1: memref<128x384xf32, #tpu.memory_space<vmem>>, %arg2: memref<1x384xf32, #tpu.memory_space<vmem>>, %arg3: memref<128x512xf32, #tpu.memory_space<vmem>>, %arg4: memref<1x512xf32, #tpu.memory_space<vmem>>, %arg5: memref<1x128xf32, #tpu.memory_space<vmem>>, %arg6: memref<1x1xf32, #tpu.memory_space<vmem>>, %arg7: memref<1x1xf32, #tpu.memory_space<vmem>>, %arg8: memref<8x384xf32, #tpu.memory_space<vmem>>) attributes {dimension_semantics = [], scalar_prefetch = 0 : i64, scratch_operands = 1 : i64, tpu.core_type = #tpu.core_type<tc>} {
    %c0 = arith.constant 0 : index
    %c0_0 = arith.constant 0 : index
    %0 = vector.load %arg0[%c0, %c0_0] : memref<8x128xf32, #tpu.memory_space<vmem>>, vector<8x128xf32>
    %c0_1 = arith.constant 0 : index
    %c0_2 = arith.constant 0 : index
    %1 = vector.load %arg1[%c0_1, %c0_2] : memref<128x384xf32, #tpu.memory_space<vmem>>, vector<128x384xf32>
    %cst = arith.constant dense<0.000000e+00> : vector<8x384xf32>
    %2 = tpu.matmul %0, %1, %cst {dimension_numbers = #tpu.dot_dimension_numbers<[1], [0], [0], [1], [0, 0, 1, 1], [], []>} : vector<8x128xf32>, vector<128x384xf32>, vector<8x384xf32> -> vector<8x384xf32>
    %c0_3 = arith.constant 0 : index
    %c0_4 = arith.constant 0 : index
    %3 = vector.load %arg2[%c0_3, %c0_4] : memref<1x384xf32, #tpu.memory_space<vmem>>, vector<1x384xf32>
    %4 = vector.broadcast %3 : vector<1x384xf32> to vector<8x384xf32>
    %5 = arith.addf %2, %4 : vector<8x384xf32>
    %c0_5 = arith.constant 0 : index
    %c0_6 = arith.constant 0 : index
    %6 = vector.load %arg8[%c0_5, %c0_6] : memref<8x384xf32, #tpu.memory_space<vmem>>, vector<8x384xf32>
    tpu.vector_store %arg8[%c0_5, %c0_6], %5 {strides = array<i32>} : memref<8x384xf32, #tpu.memory_space<vmem>>, vector<8x384xf32>,
    %c0_7 = arith.constant 0 : index
    %c0_8 = arith.constant 0 : index
    %7 = vector.load %arg3[%c0_7, %c0_8] : memref<128x512xf32, #tpu.memory_space<vmem>>, vector<128x512xf32>
    %c0_9 = arith.constant 0 : index
    %c0_10 = arith.constant 0 : index
    %8 = vector.load %arg4[%c0_9, %c0_10] : memref<1x512xf32, #tpu.memory_space<vmem>>, vector<1x512xf32>
    %9 = tpu.iota {dimensions = array<i32: 1>} : vector<1x128xi32>
    %cst_11 = arith.constant 0.000000e+00 : f32
    %10 = vector.broadcast %cst_11 : f32 to vector<1x128xf32>
    %cst_12 = arith.constant 0.000000e+00 : f32
    %11 = vector.broadcast %cst_12 : f32 to vector<1x128xf32>
    %cst_13 = arith.constant dense<0.000000e+00> : vector<1x512xf32>
    %12 = tpu.matmul %10, %7, %cst_13 {dimension_numbers = #tpu.dot_dimension_numbers<[1], [0], [0], [1], [0, 0, 1, 1], [], []>} : vector<1x128xf32>, vector<128x512xf32>, vector<1x512xf32> -> vector<1x512xf32>
    %13 = arith.addf %12, %8 : vector<1x512xf32>
    %c0_14 = arith.constant 0 : index
    %c0_15 = arith.constant 0 : index
    %14 = vector.load %arg8[%c0_14, %c0_15] : memref<8x384xf32, #tpu.memory_space<vmem>>, vector<1x384xf32>
    %15 = vector.extract_strided_slice %13 {offsets = [0, 0], sizes = [1, 128], strides = [1, 1]} : vector<1x512xf32> to vector<1x128xf32>
    %16 = vector.extract_strided_slice %14 {offsets = [0, 0], sizes = [1, 128], strides = [1, 1]} : vector<1x384xf32> to vector<1x128xf32>
    %17 = arith.addf %15, %16 : vector<1x128xf32>
    %18 = arith.negf %17 : vector<1x128xf32>
    %19 = math.exp %18 : vector<1x128xf32>
    %cst_16 = arith.constant 1.000000e+00 : f32
    %20 = vector.broadcast %cst_16 : f32 to vector<1x128xf32>
    %21 = arith.addf %20, %19 : vector<1x128xf32>
    %22 = arith.divf %20, %21 : vector<1x128xf32>
    %23 = vector.extract_strided_slice %13 {offsets = [0, 128], sizes = [1, 128], strides = [1, 1]} : vector<1x512xf32> to vector<1x128xf32>
    %24 = vector.extract_strided_slice %14 {offsets = [0, 128], sizes = [1, 128], strides = [1, 1]} : vector<1x384xf32> to vector<1x128xf32>
    %25 = arith.addf %23, %24 : vector<1x128xf32>
    %26 = arith.negf %25 : vector<1x128xf32>
    %27 = math.exp %26 : vector<1x128xf32>
    %cst_17 = arith.constant 1.000000e+00 : f32
    %28 = vector.broadcast %cst_17 : f32 to vector<1x128xf32>
    %29 = arith.addf %28, %27 : vector<1x128xf32>
    %30 = arith.divf %28, %29 : vector<1x128xf32>
    %31 = vector.extract_strided_slice %13 {offsets = [0, 256], sizes = [1, 128], strides = [1, 1]} : vector<1x512xf32> to vector<1x128xf32>
    %32 = vector.extract_strided_slice %14 {offsets = [0, 256], sizes = [1, 128], strides = [1, 1]} : vector<1x384xf32> to vector<1x128xf32>
    %33 = arith.addf %31, %32 : vector<1x128xf32>
    %34 = vector.extract_strided_slice %13 {offsets = [0, 384], sizes = [1, 128], strides = [1, 1]} : vector<1x512xf32> to vector<1x128xf32>
    %35 = arith.mulf %22, %34 : vector<1x128xf32>
    %36 = arith.addf %33, %35 : vector<1x128xf32>
    %37 = math.tanh %36 : vector<1x128xf32>
    %cst_18 = arith.constant 1.000000e+00 : f32
    %38 = vector.broadcast %cst_18 : f32 to vector<1x128xf32>
    %39 = arith.subf %38, %30 : vector<1x128xf32>
    %40 = arith.mulf %39, %37 : vector<1x128xf32>
    %41 = arith.mulf %30, %10 : vector<1x128xf32>
    %42 = arith.addf %40, %41 : vector<1x128xf32>
    %c0_i32 = arith.constant 0 : i32
    %43 = vector.broadcast %c0_i32 : i32 to vector<1x128xi32>
    %44 = arith.cmpi sge, %9, %43 : vector<1x128xi32>
    %c32_i32 = arith.constant 32 : i32
    %45 = vector.broadcast %c32_i32 : i32 to vector<1x128xi32>
    %46 = arith.cmpi slt, %9, %45 : vector<1x128xi32>
    %47 = arith.andi %44, %46 : vector<1x128xi1>
    %48 = arith.select %47, %42, %10 : vector<1x128xi1>, vector<1x128xf32>
    %cst_19 = arith.constant dense<0.000000e+00> : vector<1x512xf32>
    %49 = tpu.matmul %48, %7, %cst_19 {dimension_numbers = #tpu.dot_dimension_numbers<[1], [0], [0], [1], [0, 0, 1, 1], [], []>} : vector<1x128xf32>, vector<128x512xf32>, vector<1x512xf32> -> vector<1x512xf32>
    %50 = arith.addf %49, %8 : vector<1x512xf32>
    %c1 = arith.constant 1 : index
    %c0_20 = arith.constant 0 : index
    %51 = vector.load %arg8[%c1, %c0_20] : memref<8x384xf32, #tpu.memory_space<vmem>>, vector<1x384xf32>
    %52 = vector.extract_strided_slice %50 {offsets = [0, 0], sizes = [1, 128], strides = [1, 1]} : vector<1x512xf32> to vector<1x128xf32>
    %53 = vector.extract_strided_slice %51 {offsets = [0, 0], sizes = [1, 128], strides = [1, 1]} : vector<1x384xf32> to vector<1x128xf32>
    %54 = arith.addf %52, %53 : vector<1x128xf32>
    %55 = arith.negf %54 : vector<1x128xf32>
    %56 = math.exp %55 : vector<1x128xf32>
    %cst_21 = arith.constant 1.000000e+00 : f32
    %57 = vector.broadcast %cst_21 : f32 to vector<1x128xf32>
    %58 = arith.addf %57, %56 : vector<1x128xf32>
    %59 = arith.divf %57, %58 : vector<1x128xf32>
    %60 = vector.extract_strided_slice %50 {offsets = [0, 128], sizes = [1, 128], strides = [1, 1]} : vector<1x512xf32> to vector<1x128xf32>
    %61 = vector.extract_strided_slice %51 {offsets = [0, 128], sizes = [1, 128], strides = [1, 1]} : vector<1x384xf32> to vector<1x128xf32>
    %62 = arith.addf %60, %61 : vector<1x128xf32>
    %63 = arith.negf %62 : vector<1x128xf32>
    %64 = math.exp %63 : vector<1x128xf32>
    %cst_22 = arith.constant 1.000000e+00 : f32
    %65 = vector.broadcast %cst_22 : f32 to vector<1x128xf32>
    %66 = arith.addf %65, %64 : vector<1x128xf32>
    %67 = arith.divf %65, %66 : vector<1x128xf32>
    %68 = vector.extract_strided_slice %50 {offsets = [0, 256], sizes = [1, 128], strides = [1, 1]} : vector<1x512xf32> to vector<1x128xf32>
    %69 = vector.extract_strided_slice %51 {offsets = [0, 256], sizes = [1, 128], strides = [1, 1]} : vector<1x384xf32> to vector<1x128xf32>
    %70 = arith.addf %68, %69 : vector<1x128xf32>
    %71 = vector.extract_strided_slice %50 {offsets = [0, 384], sizes = [1, 128], strides = [1, 1]} : vector<1x512xf32> to vector<1x128xf32>
    %72 = arith.mulf %59, %71 : vector<1x128xf32>
    %73 = arith.addf %70, %72 : vector<1x128xf32>
    %74 = math.tanh %73 : vector<1x128xf32>
    %cst_23 = arith.constant 1.000000e+00 : f32
    %75 = vector.broadcast %cst_23 : f32 to vector<1x128xf32>
    %76 = arith.subf %75, %67 : vector<1x128xf32>
    %77 = arith.mulf %76, %74 : vector<1x128xf32>
    %78 = arith.mulf %67, %48 : vector<1x128xf32>
    %79 = arith.addf %77, %78 : vector<1x128xf32>
    %cst_24 = arith.constant 0.000000e+00 : f32
    %80 = vector.broadcast %cst_24 : f32 to vector<1x128xf32>
    %81 = arith.maximumf %79, %80 : vector<1x128xf32>
    %82 = arith.addf %11, %81 : vector<1x128xf32>
    %cst_25 = arith.constant dense<0.000000e+00> : vector<1x512xf32>
    %83 = tpu.matmul %79, %7, %cst_25 {dimension_numbers = #tpu.dot_dimension_numbers<[1], [0], [0], [1], [0, 0, 1, 1], [], []>} : vector<1x128xf32>, vector<128x512xf32>, vector<1x512xf32> -> vector<1x512xf32>
    %84 = arith.addf %83, %8 : vector<1x512xf32>
    %c2 = arith.constant 2 : index
    %c0_26 = arith.constant 0 : index
    %85 = vector.load %arg8[%c2, %c0_26] : memref<8x384xf32, #tpu.memory_space<vmem>>, vector<1x384xf32>
    %86 = vector.extract_strided_slice %84 {offsets = [0, 0], sizes = [1, 128], strides = [1, 1]} : vector<1x512xf32> to vector<1x128xf32>
    %87 = vector.extract_strided_slice %85 {offsets = [0, 0], sizes = [1, 128], strides = [1, 1]} : vector<1x384xf32> to vector<1x128xf32>
    %88 = arith.addf %86, %87 : vector<1x128xf32>
    %89 = arith.negf %88 : vector<1x128xf32>
    %90 = math.exp %89 : vector<1x128xf32>
    %cst_27 = arith.constant 1.000000e+00 : f32
    %91 = vector.broadcast %cst_27 : f32 to vector<1x128xf32>
    %92 = arith.addf %91, %90 : vector<1x128xf32>
    %93 = arith.divf %91, %92 : vector<1x128xf32>
    %94 = vector.extract_strided_slice %84 {offsets = [0, 128], sizes = [1, 128], strides = [1, 1]} : vector<1x512xf32> to vector<1x128xf32>
    %95 = vector.extract_strided_slice %85 {offsets = [0, 128], sizes = [1, 128], strides = [1, 1]} : vector<1x384xf32> to vector<1x128xf32>
    %96 = arith.addf %94, %95 : vector<1x128xf32>
    %97 = arith.negf %96 : vector<1x128xf32>
    %98 = math.exp %97 : vector<1x128xf32>
    %cst_28 = arith.constant 1.000000e+00 : f32
    %99 = vector.broadcast %cst_28 : f32 to vector<1x128xf32>
    %100 = arith.addf %99, %98 : vector<1x128xf32>
    %101 = arith.divf %99, %100 : vector<1x128xf32>
    %102 = vector.extract_strided_slice %84 {offsets = [0, 256], sizes = [1, 128], strides = [1, 1]} : vector<1x512xf32> to vector<1x128xf32>
    %103 = vector.extract_strided_slice %85 {offsets = [0, 256], sizes = [1, 128], strides = [1, 1]} : vector<1x384xf32> to vector<1x128xf32>
    %104 = arith.addf %102, %103 : vector<1x128xf32>
    %105 = vector.extract_strided_slice %84 {offsets = [0, 384], sizes = [1, 128], strides = [1, 1]} : vector<1x512xf32> to vector<1x128xf32>
    %106 = arith.mulf %93, %105 : vector<1x128xf32>
    %107 = arith.addf %104, %106 : vector<1x128xf32>
    %108 = math.tanh %107 : vector<1x128xf32>
    %cst_29 = arith.constant 1.000000e+00 : f32
    %109 = vector.broadcast %cst_29 : f32 to vector<1x128xf32>
    %110 = arith.subf %109, %101 : vector<1x128xf32>
    %111 = arith.mulf %110, %108 : vector<1x128xf32>
    %112 = arith.mulf %101, %79 : vector<1x128xf32>
    %113 = arith.addf %111, %112 : vector<1x128xf32>
    %cst_30 = arith.constant 0.000000e+00 : f32
    %114 = vector.broadcast %cst_30 : f32 to vector<1x128xf32>
    %115 = arith.maximumf %113, %114 : vector<1x128xf32>
    %116 = arith.addf %82, %115 : vector<1x128xf32>
    %cst_31 = arith.constant dense<0.000000e+00> : vector<1x512xf32>
    %117 = tpu.matmul %113, %7, %cst_31 {dimension_numbers = #tpu.dot_dimension_numbers<[1], [0], [0], [1], [0, 0, 1, 1], [], []>} : vector<1x128xf32>, vector<128x512xf32>, vector<1x512xf32> -> vector<1x512xf32>
    %118 = arith.addf %117, %8 : vector<1x512xf32>
    %c3 = arith.constant 3 : index
    %c0_32 = arith.constant 0 : index
    %119 = vector.load %arg8[%c3, %c0_32] : memref<8x384xf32, #tpu.memory_space<vmem>>, vector<1x384xf32>
    %120 = vector.extract_strided_slice %118 {offsets = [0, 0], sizes = [1, 128], strides = [1, 1]} : vector<1x512xf32> to vector<1x128xf32>
    %121 = vector.extract_strided_slice %119 {offsets = [0, 0], sizes = [1, 128], strides = [1, 1]} : vector<1x384xf32> to vector<1x128xf32>
    %122 = arith.addf %120, %121 : vector<1x128xf32>
    %123 = arith.negf %122 : vector<1x128xf32>
    %124 = math.exp %123 : vector<1x128xf32>
    %cst_33 = arith.constant 1.000000e+00 : f32
    %125 = vector.broadcast %cst_33 : f32 to vector<1x128xf32>
    %126 = arith.addf %125, %124 : vector<1x128xf32>
    %127 = arith.divf %125, %126 : vector<1x128xf32>
    %128 = vector.extract_strided_slice %118 {offsets = [0, 128], sizes = [1, 128], strides = [1, 1]} : vector<1x512xf32> to vector<1x128xf32>
    %129 = vector.extract_strided_slice %119 {offsets = [0, 128], sizes = [1, 128], strides = [1, 1]} : vector<1x384xf32> to vector<1x128xf32>
    %130 = arith.addf %128, %129 : vector<1x128xf32>
    %131 = arith.negf %130 : vector<1x128xf32>
    %132 = math.exp %131 : vector<1x128xf32>
    %cst_34 = arith.constant 1.000000e+00 : f32
    %133 = vector.broadcast %cst_34 : f32 to vector<1x128xf32>
    %134 = arith.addf %133, %132 : vector<1x128xf32>
    %135 = arith.divf %133, %134 : vector<1x128xf32>
    %136 = vector.extract_strided_slice %118 {offsets = [0, 256], sizes = [1, 128], strides = [1, 1]} : vector<1x512xf32> to vector<1x128xf32>
    %137 = vector.extract_strided_slice %119 {offsets = [0, 256], sizes = [1, 128], strides = [1, 1]} : vector<1x384xf32> to vector<1x128xf32>
    %138 = arith.addf %136, %137 : vector<1x128xf32>
    %139 = vector.extract_strided_slice %118 {offsets = [0, 384], sizes = [1, 128], strides = [1, 1]} : vector<1x512xf32> to vector<1x128xf32>
    %140 = arith.mulf %127, %139 : vector<1x128xf32>
    %141 = arith.addf %138, %140 : vector<1x128xf32>
    %142 = math.tanh %141 : vector<1x128xf32>
    %cst_35 = arith.constant 1.000000e+00 : f32
    %143 = vector.broadcast %cst_35 : f32 to vector<1x128xf32>
    %144 = arith.subf %143, %135 : vector<1x128xf32>
    %145 = arith.mulf %144, %142 : vector<1x128xf32>
    %146 = arith.mulf %135, %113 : vector<1x128xf32>
    %147 = arith.addf %145, %146 : vector<1x128xf32>
    %cst_36 = arith.constant 0.000000e+00 : f32
    %148 = vector.broadcast %cst_36 : f32 to vector<1x128xf32>
    %149 = arith.maximumf %147, %148 : vector<1x128xf32>
    %150 = arith.addf %116, %149 : vector<1x128xf32>
    %cst_37 = arith.constant dense<0.000000e+00> : vector<1x512xf32>
    %151 = tpu.matmul %147, %7, %cst_37 {dimension_numbers = #tpu.dot_dimension_numbers<[1], [0], [0], [1], [0, 0, 1, 1], [], []>} : vector<1x128xf32>, vector<128x512xf32>, vector<1x512xf32> -> vector<1x512xf32>
    %152 = arith.addf %151, %8 : vector<1x512xf32>
    %c4 = arith.constant 4 : index
    %c0_38 = arith.constant 0 : index
    %153 = vector.load %arg8[%c4, %c0_38] : memref<8x384xf32, #tpu.memory_space<vmem>>, vector<1x384xf32>
    %154 = vector.extract_strided_slice %152 {offsets = [0, 0], sizes = [1, 128], strides = [1, 1]} : vector<1x512xf32> to vector<1x128xf32>
    %155 = vector.extract_strided_slice %153 {offsets = [0, 0], sizes = [1, 128], strides = [1, 1]} : vector<1x384xf32> to vector<1x128xf32>
    %156 = arith.addf %154, %155 : vector<1x128xf32>
    %157 = arith.negf %156 : vector<1x128xf32>
    %158 = math.exp %157 : vector<1x128xf32>
    %cst_39 = arith.constant 1.000000e+00 : f32
    %159 = vector.broadcast %cst_39 : f32 to vector<1x128xf32>
    %160 = arith.addf %159, %158 : vector<1x128xf32>
    %161 = arith.divf %159, %160 : vector<1x128xf32>
    %162 = vector.extract_strided_slice %152 {offsets = [0, 128], sizes = [1, 128], strides = [1, 1]} : vector<1x512xf32> to vector<1x128xf32>
    %163 = vector.extract_strided_slice %153 {offsets = [0, 128], sizes = [1, 128], strides = [1, 1]} : vector<1x384xf32> to vector<1x128xf32>
    %164 = arith.addf %162, %163 : vector<1x128xf32>
    %165 = arith.negf %164 : vector<1x128xf32>
    %166 = math.exp %165 : vector<1x128xf32>
    %cst_40 = arith.constant 1.000000e+00 : f32
    %167 = vector.broadcast %cst_40 : f32 to vector<1x128xf32>
    %168 = arith.addf %167, %166 : vector<1x128xf32>
    %169 = arith.divf %167, %168 : vector<1x128xf32>
    %170 = vector.extract_strided_slice %152 {offsets = [0, 256], sizes = [1, 128], strides = [1, 1]} : vector<1x512xf32> to vector<1x128xf32>
    %171 = vector.extract_strided_slice %153 {offsets = [0, 256], sizes = [1, 128], strides = [1, 1]} : vector<1x384xf32> to vector<1x128xf32>
    %172 = arith.addf %170, %171 : vector<1x128xf32>
    %173 = vector.extract_strided_slice %152 {offsets = [0, 384], sizes = [1, 128], strides = [1, 1]} : vector<1x512xf32> to vector<1x128xf32>
    %174 = arith.mulf %161, %173 : vector<1x128xf32>
    %175 = arith.addf %172, %174 : vector<1x128xf32>
    %176 = math.tanh %175 : vector<1x128xf32>
    %cst_41 = arith.constant 1.000000e+00 : f32
    %177 = vector.broadcast %cst_41 : f32 to vector<1x128xf32>
    %178 = arith.subf %177, %169 : vector<1x128xf32>
    %179 = arith.mulf %178, %176 : vector<1x128xf32>
    %180 = arith.mulf %169, %147 : vector<1x128xf32>
    %181 = arith.addf %179, %180 : vector<1x128xf32>
    %cst_42 = arith.constant 0.000000e+00 : f32
    %182 = vector.broadcast %cst_42 : f32 to vector<1x128xf32>
    %183 = arith.maximumf %181, %182 : vector<1x128xf32>
    %184 = arith.addf %150, %183 : vector<1x128xf32>
    %cst_43 = arith.constant dense<0.000000e+00> : vector<1x512xf32>
    %185 = tpu.matmul %181, %7, %cst_43 {dimension_numbers = #tpu.dot_dimension_numbers<[1], [0], [0], [1], [0, 0, 1, 1], [], []>} : vector<1x128xf32>, vector<128x512xf32>, vector<1x512xf32> -> vector<1x512xf32>
    %186 = arith.addf %185, %8 : vector<1x512xf32>
    %c5 = arith.constant 5 : index
    %c0_44 = arith.constant 0 : index
    %187 = vector.load %arg8[%c5, %c0_44] : memref<8x384xf32, #tpu.memory_space<vmem>>, vector<1x384xf32>
    %188 = vector.extract_strided_slice %186 {offsets = [0, 0], sizes = [1, 128], strides = [1, 1]} : vector<1x512xf32> to vector<1x128xf32>
    %189 = vector.extract_strided_slice %187 {offsets = [0, 0], sizes = [1, 128], strides = [1, 1]} : vector<1x384xf32> to vector<1x128xf32>
    %190 = arith.addf %188, %189 : vector<1x128xf32>
    %191 = arith.negf %190 : vector<1x128xf32>
    %192 = math.exp %191 : vector<1x128xf32>
    %cst_45 = arith.constant 1.000000e+00 : f32
    %193 = vector.broadcast %cst_45 : f32 to vector<1x128xf32>
    %194 = arith.addf %193, %192 : vector<1x128xf32>
    %195 = arith.divf %193, %194 : vector<1x128xf32>
    %196 = vector.extract_strided_slice %186 {offsets = [0, 128], sizes = [1, 128], strides = [1, 1]} : vector<1x512xf32> to vector<1x128xf32>
    %197 = vector.extract_strided_slice %187 {offsets = [0, 128], sizes = [1, 128], strides = [1, 1]} : vector<1x384xf32> to vector<1x128xf32>
    %198 = arith.addf %196, %197 : vector<1x128xf32>
    %199 = arith.negf %198 : vector<1x128xf32>
    %200 = math.exp %199 : vector<1x128xf32>
    %cst_46 = arith.constant 1.000000e+00 : f32
    %201 = vector.broadcast %cst_46 : f32 to vector<1x128xf32>
    %202 = arith.addf %201, %200 : vector<1x128xf32>
    %203 = arith.divf %201, %202 : vector<1x128xf32>
    %204 = vector.extract_strided_slice %186 {offsets = [0, 256], sizes = [1, 128], strides = [1, 1]} : vector<1x512xf32> to vector<1x128xf32>
    %205 = vector.extract_strided_slice %187 {offsets = [0, 256], sizes = [1, 128], strides = [1, 1]} : vector<1x384xf32> to vector<1x128xf32>
    %206 = arith.addf %204, %205 : vector<1x128xf32>
    %207 = vector.extract_strided_slice %186 {offsets = [0, 384], sizes = [1, 128], strides = [1, 1]} : vector<1x512xf32> to vector<1x128xf32>
    %208 = arith.mulf %195, %207 : vector<1x128xf32>
    %209 = arith.addf %206, %208 : vector<1x128xf32>
    %210 = math.tanh %209 : vector<1x128xf32>
    %cst_47 = arith.constant 1.000000e+00 : f32
    %211 = vector.broadcast %cst_47 : f32 to vector<1x128xf32>
    %212 = arith.subf %211, %203 : vector<1x128xf32>
    %213 = arith.mulf %212, %210 : vector<1x128xf32>
    %214 = arith.mulf %203, %181 : vector<1x128xf32>
    %215 = arith.addf %213, %214 : vector<1x128xf32>
    %cst_48 = arith.constant 0.000000e+00 : f32
    %216 = vector.broadcast %cst_48 : f32 to vector<1x128xf32>
    %217 = arith.maximumf %215, %216 : vector<1x128xf32>
    %218 = arith.addf %184, %217 : vector<1x128xf32>
    %cst_49 = arith.constant dense<0.000000e+00> : vector<1x512xf32>
    %219 = tpu.matmul %215, %7, %cst_49 {dimension_numbers = #tpu.dot_dimension_numbers<[1], [0], [0], [1], [0, 0, 1, 1], [], []>} : vector<1x128xf32>, vector<128x512xf32>, vector<1x512xf32> -> vector<1x512xf32>
    %220 = arith.addf %219, %8 : vector<1x512xf32>
    %c6 = arith.constant 6 : index
    %c0_50 = arith.constant 0 : index
    %221 = vector.load %arg8[%c6, %c0_50] : memref<8x384xf32, #tpu.memory_space<vmem>>, vector<1x384xf32>
    %222 = vector.extract_strided_slice %220 {offsets = [0, 0], sizes = [1, 128], strides = [1, 1]} : vector<1x512xf32> to vector<1x128xf32>
    %223 = vector.extract_strided_slice %221 {offsets = [0, 0], sizes = [1, 128], strides = [1, 1]} : vector<1x384xf32> to vector<1x128xf32>
    %224 = arith.addf %222, %223 : vector<1x128xf32>
    %225 = arith.negf %224 : vector<1x128xf32>
    %226 = math.exp %225 : vector<1x128xf32>
    %cst_51 = arith.constant 1.000000e+00 : f32
    %227 = vector.broadcast %cst_51 : f32 to vector<1x128xf32>
    %228 = arith.addf %227, %226 : vector<1x128xf32>
    %229 = arith.divf %227, %228 : vector<1x128xf32>
    %230 = vector.extract_strided_slice %220 {offsets = [0, 128], sizes = [1, 128], strides = [1, 1]} : vector<1x512xf32> to vector<1x128xf32>
    %231 = vector.extract_strided_slice %221 {offsets = [0, 128], sizes = [1, 128], strides = [1, 1]} : vector<1x384xf32> to vector<1x128xf32>
    %232 = arith.addf %230, %231 : vector<1x128xf32>
    %233 = arith.negf %232 : vector<1x128xf32>
    %234 = math.exp %233 : vector<1x128xf32>
    %cst_52 = arith.constant 1.000000e+00 : f32
    %235 = vector.broadcast %cst_52 : f32 to vector<1x128xf32>
    %236 = arith.addf %235, %234 : vector<1x128xf32>
    %237 = arith.divf %235, %236 : vector<1x128xf32>
    %238 = vector.extract_strided_slice %220 {offsets = [0, 256], sizes = [1, 128], strides = [1, 1]} : vector<1x512xf32> to vector<1x128xf32>
    %239 = vector.extract_strided_slice %221 {offsets = [0, 256], sizes = [1, 128], strides = [1, 1]} : vector<1x384xf32> to vector<1x128xf32>
    %240 = arith.addf %238, %239 : vector<1x128xf32>
    %241 = vector.extract_strided_slice %220 {offsets = [0, 384], sizes = [1, 128], strides = [1, 1]} : vector<1x512xf32> to vector<1x128xf32>
    %242 = arith.mulf %229, %241 : vector<1x128xf32>
    %243 = arith.addf %240, %242 : vector<1x128xf32>
    %244 = math.tanh %243 : vector<1x128xf32>
    %cst_53 = arith.constant 1.000000e+00 : f32
    %245 = vector.broadcast %cst_53 : f32 to vector<1x128xf32>
    %246 = arith.subf %245, %237 : vector<1x128xf32>
    %247 = arith.mulf %246, %244 : vector<1x128xf32>
    %248 = arith.mulf %237, %215 : vector<1x128xf32>
    %249 = arith.addf %247, %248 : vector<1x128xf32>
    %cst_54 = arith.constant 0.000000e+00 : f32
    %250 = vector.broadcast %cst_54 : f32 to vector<1x128xf32>
    %251 = arith.maximumf %249, %250 : vector<1x128xf32>
    %252 = arith.addf %218, %251 : vector<1x128xf32>
    %cst_55 = arith.constant dense<0.000000e+00> : vector<1x512xf32>
    %253 = tpu.matmul %249, %7, %cst_55 {dimension_numbers = #tpu.dot_dimension_numbers<[1], [0], [0], [1], [0, 0, 1, 1], [], []>} : vector<1x128xf32>, vector<128x512xf32>, vector<1x512xf32> -> vector<1x512xf32>
    %254 = arith.addf %253, %8 : vector<1x512xf32>
    %c7 = arith.constant 7 : index
    %c0_56 = arith.constant 0 : index
    %255 = vector.load %arg8[%c7, %c0_56] : memref<8x384xf32, #tpu.memory_space<vmem>>, vector<1x384xf32>
    %256 = vector.extract_strided_slice %254 {offsets = [0, 0], sizes = [1, 128], strides = [1, 1]} : vector<1x512xf32> to vector<1x128xf32>
    %257 = vector.extract_strided_slice %255 {offsets = [0, 0], sizes = [1, 128], strides = [1, 1]} : vector<1x384xf32> to vector<1x128xf32>
    %258 = arith.addf %256, %257 : vector<1x128xf32>
    %259 = arith.negf %258 : vector<1x128xf32>
    %260 = math.exp %259 : vector<1x128xf32>
    %cst_57 = arith.constant 1.000000e+00 : f32
    %261 = vector.broadcast %cst_57 : f32 to vector<1x128xf32>
    %262 = arith.addf %261, %260 : vector<1x128xf32>
    %263 = arith.divf %261, %262 : vector<1x128xf32>
    %264 = vector.extract_strided_slice %254 {offsets = [0, 128], sizes = [1, 128], strides = [1, 1]} : vector<1x512xf32> to vector<1x128xf32>
    %265 = vector.extract_strided_slice %255 {offsets = [0, 128], sizes = [1, 128], strides = [1, 1]} : vector<1x384xf32> to vector<1x128xf32>
    %266 = arith.addf %264, %265 : vector<1x128xf32>
    %267 = arith.negf %266 : vector<1x128xf32>
    %268 = math.exp %267 : vector<1x128xf32>
    %cst_58 = arith.constant 1.000000e+00 : f32
    %269 = vector.broadcast %cst_58 : f32 to vector<1x128xf32>
    %270 = arith.addf %269, %268 : vector<1x128xf32>
    %271 = arith.divf %269, %270 : vector<1x128xf32>
    %272 = vector.extract_strided_slice %254 {offsets = [0, 256], sizes = [1, 128], strides = [1, 1]} : vector<1x512xf32> to vector<1x128xf32>
    %273 = vector.extract_strided_slice %255 {offsets = [0, 256], sizes = [1, 128], strides = [1, 1]} : vector<1x384xf32> to vector<1x128xf32>
    %274 = arith.addf %272, %273 : vector<1x128xf32>
    %275 = vector.extract_strided_slice %254 {offsets = [0, 384], sizes = [1, 128], strides = [1, 1]} : vector<1x512xf32> to vector<1x128xf32>
    %276 = arith.mulf %263, %275 : vector<1x128xf32>
    %277 = arith.addf %274, %276 : vector<1x128xf32>
    %278 = math.tanh %277 : vector<1x128xf32>
    %cst_59 = arith.constant 1.000000e+00 : f32
    %279 = vector.broadcast %cst_59 : f32 to vector<1x128xf32>
    %280 = arith.subf %279, %271 : vector<1x128xf32>
    %281 = arith.mulf %280, %278 : vector<1x128xf32>
    %282 = arith.mulf %271, %249 : vector<1x128xf32>
    %283 = arith.addf %281, %282 : vector<1x128xf32>
    %cst_60 = arith.constant 0.000000e+00 : f32
    %284 = vector.broadcast %cst_60 : f32 to vector<1x128xf32>
    %285 = arith.maximumf %283, %284 : vector<1x128xf32>
    %286 = arith.addf %252, %285 : vector<1x128xf32>
    %cst_61 = arith.constant dense<0.000000e+00> : vector<1x512xf32>
    %287 = tpu.matmul %283, %7, %cst_61 {dimension_numbers = #tpu.dot_dimension_numbers<[1], [0], [0], [1], [0, 0, 1, 1], [], []>} : vector<1x128xf32>, vector<128x512xf32>, vector<1x512xf32> -> vector<1x512xf32>
    %288 = arith.addf %287, %8 : vector<1x512xf32>
    %c7_62 = arith.constant 7 : index
    %c0_63 = arith.constant 0 : index
    %289 = vector.load %arg8[%c7_62, %c0_63] : memref<8x384xf32, #tpu.memory_space<vmem>>, vector<1x384xf32>
    %290 = vector.extract_strided_slice %288 {offsets = [0, 0], sizes = [1, 128], strides = [1, 1]} : vector<1x512xf32> to vector<1x128xf32>
    %291 = vector.extract_strided_slice %289 {offsets = [0, 0], sizes = [1, 128], strides = [1, 1]} : vector<1x384xf32> to vector<1x128xf32>
    %292 = arith.addf %290, %291 : vector<1x128xf32>
    %293 = arith.negf %292 : vector<1x128xf32>
    %294 = math.exp %293 : vector<1x128xf32>
    %cst_64 = arith.constant 1.000000e+00 : f32
    %295 = vector.broadcast %cst_64 : f32 to vector<1x128xf32>
    %296 = arith.addf %295, %294 : vector<1x128xf32>
    %297 = arith.divf %295, %296 : vector<1x128xf32>
    %298 = vector.extract_strided_slice %288 {offsets = [0, 128], sizes = [1, 128], strides = [1, 1]} : vector<1x512xf32> to vector<1x128xf32>
    %299 = vector.extract_strided_slice %289 {offsets = [0, 128], sizes = [1, 128], strides = [1, 1]} : vector<1x384xf32> to vector<1x128xf32>
    %300 = arith.addf %298, %299 : vector<1x128xf32>
    %301 = arith.negf %300 : vector<1x128xf32>
    %302 = math.exp %301 : vector<1x128xf32>
    %cst_65 = arith.constant 1.000000e+00 : f32
    %303 = vector.broadcast %cst_65 : f32 to vector<1x128xf32>
    %304 = arith.addf %303, %302 : vector<1x128xf32>
    %305 = arith.divf %303, %304 : vector<1x128xf32>
    %306 = vector.extract_strided_slice %288 {offsets = [0, 256], sizes = [1, 128], strides = [1, 1]} : vector<1x512xf32> to vector<1x128xf32>
    %307 = vector.extract_strided_slice %289 {offsets = [0, 256], sizes = [1, 128], strides = [1, 1]} : vector<1x384xf32> to vector<1x128xf32>
    %308 = arith.addf %306, %307 : vector<1x128xf32>
    %309 = vector.extract_strided_slice %288 {offsets = [0, 384], sizes = [1, 128], strides = [1, 1]} : vector<1x512xf32> to vector<1x128xf32>
    %310 = arith.mulf %297, %309 : vector<1x128xf32>
    %311 = arith.addf %308, %310 : vector<1x128xf32>
    %312 = math.tanh %311 : vector<1x128xf32>
    %cst_66 = arith.constant 1.000000e+00 : f32
    %313 = vector.broadcast %cst_66 : f32 to vector<1x128xf32>
    %314 = arith.subf %313, %305 : vector<1x128xf32>
    %315 = arith.mulf %314, %312 : vector<1x128xf32>
    %316 = arith.mulf %305, %283 : vector<1x128xf32>
    %317 = arith.addf %315, %316 : vector<1x128xf32>
    %c32_i32_67 = arith.constant 32 : i32
    %318 = vector.broadcast %c32_i32_67 : i32 to vector<1x128xi32>
    %319 = arith.cmpi sge, %9, %318 : vector<1x128xi32>
    %c64_i32 = arith.constant 64 : i32
    %320 = vector.broadcast %c64_i32 : i32 to vector<1x128xi32>
    %321 = arith.cmpi slt, %9, %320 : vector<1x128xi32>
    %322 = arith.andi %319, %321 : vector<1x128xi1>
    %323 = arith.select %322, %317, %283 : vector<1x128xi1>, vector<1x128xf32>
    %cst_68 = arith.constant 0.000000e+00 : f32
    %324 = vector.broadcast %cst_68 : f32 to vector<1x128xf32>
    %325 = arith.maximumf %323, %324 : vector<1x128xf32>
    %326 = arith.addf %286, %325 : vector<1x128xf32>
    %c0_69 = arith.constant 0 : index
    %c0_70 = arith.constant 0 : index
    %327 = vector.load %arg5[%c0_69, %c0_70] : memref<1x128xf32, #tpu.memory_space<vmem>>, vector<1x128xf32>
    %328 = arith.mulf %326, %327 : vector<1x128xf32>
    %cst_71 = arith.constant dense<0.000000e+00> : vector<1xf32>
    %329 = vector.multi_reduction <add>, %328, %cst_71 [1] : vector<1x128xf32> to vector<1xf32>
    %330 = vector.shape_cast %329 : vector<1xf32> to vector<1x1xf32>
    %c0_72 = arith.constant 0 : index
    %c0_73 = arith.constant 0 : index
    %331 = vector.load %arg6[%c0_72, %c0_73] : memref<1x1xf32, #tpu.memory_space<vmem>>, vector<1x1xf32>
    %cst_74 = arith.constant 8.000000e+00 : f32
    %332 = vector.broadcast %cst_74 : f32 to vector<1x1xf32>
    %333 = arith.mulf %332, %331 : vector<1x1xf32>
    %334 = arith.addf %330, %333 : vector<1x1xf32>
    %c0_75 = arith.constant 0 : index
    %c0_76 = arith.constant 0 : index
    %335 = vector.load %arg7[%c0_75, %c0_76] : memref<1x1xf32, #tpu.memory_space<vmem>>, vector<1x1xf32>
    tpu.vector_store %arg7[%c0_75, %c0_76], %334 {strides = array<i32>} : memref<1x1xf32, #tpu.memory_space<vmem>>, vector<1x1xf32>,
    return
  }
}

</mosaic_0001>

<llo_original>
// kernel: tpu_custom_call.1
$region0: #{tpu_custom_call.1}
  #allocation0 [shape = 'u32[]', space=smem, size = 0x4, offset = 0x4, fixed_abs, tag = 'smem constant byte address 0x4 - core index']
  #allocation1 [shape = 'u32[144,128]{1,0:T(1,128)}', space=vmem, size = 0x12000, scoped, tag = 'internal scratch']
  #allocation2 [shape = 'f32[8,384]{1,0:T(8,128)}', space=vmem, size = 0x3000, scoped, tag = 'scratch operand']
  #allocation3 [shape = 'f32[1,1]{1,0:T(1,128)S(1)}', space=vmem, size = 0x200, scoped, tag = 'scoped memory for tpu_custom_call.1']
  %s0 = inlined_call_operand.hbm [shape: f32[8,128], index: 0, kind: input, shape index: {}]
  %s1 = inlined_call_operand.hbm [shape: f32[128,384], index: 1, kind: input, shape index: {}]
  %s2 = inlined_call_operand.vmem [shape: f32[1,384], index: 2, kind: input, shape index: {}]
  %s3 = inlined_call_operand.hbm [shape: f32[128,512], index: 3, kind: input, shape index: {}]
  %s4 = inlined_call_operand.vmem [shape: f32[1,512], index: 4, kind: input, shape index: {}]
  %s5 = inlined_call_operand.vmem [shape: f32[1,128], index: 5, kind: input, shape index: {}]
  %s6 = inlined_call_operand.<no memory space> [shape: f32[1,1], index: 6, kind: input, shape index: {}]
  %s7 = inlined_call_operand.hbm [shape: f32[1,1], index: 7, kind: output, shape index: {}]
  %s8 = sld [smem:[#allocation0]]
  $region50: #{tpu_custom_call.1} parent=0
    _
  %s10 = ssub.s32 1, %s8
  %s11 = scalar_select 0, %s10, %s8
  %v12 = vstv %s6
  %13 = vst [vmem:[#allocation3] sm:$0x1] %v12
  $region1: #{tpu_custom_call.1} parent=0
    #allocation4 [shape = 'u8[4096]{0}', space=vmem, size = 0x1000, scoped, tag = 'input window, operand 0, single buffered']
    #allocation5 [shape = 's32[1]{0}', space=sflag, size = 0x4, scoped, tag = 'scoped memory for tpu_custom_call.1']
    #allocation6 [shape = 's32[1]{0}', space=sflag, size = 0x4, scoped, tag = 'scoped memory for tpu_custom_call.1']
    #allocation7 [shape = 'u8[196608]{0}', space=vmem, size = 0x30000, scoped, tag = 'input window, operand 1, single buffered']
    #allocation8 [shape = 's32[1]{0}', space=sflag, size = 0x4, scoped, tag = 'scoped memory for tpu_custom_call.1']
    #allocation9 [shape = 'u8[262144]{0}', space=vmem, size = 0x40000, scoped, tag = 'input window, operand 3, single buffered']
    #allocation10 [shape = 'u8[512]{0}', space=vmem, size = 0x400, scoped, tag = 'output window, operand 0, single buffered']
    %14 = vsyncpa [#allocation5], 0
    %15 = vsyncpa [#allocation8], 0
    %16 = vsyncpa [#allocation6], 0
    // Predicated region
    $region2: #{tpu_custom_call.1} parent=1 // pred_check
      _
    $region3: #{tpu_custom_call.1} parent=1 // pred_check_branch
      %18 = sbr.rel (0) target = $region5
    $region4: #{tpu_custom_call.1} parent=1 // pred_region
      %s20 = ssub.s32 128, 128
      %21 = vsyncadd [#allocation5], %s20
      %s23 = sshll.u32 [#allocation4], 4
      %s24 = int_to_ptr.vmem [resolvable:$true] %s23
      %26 = dma.hbm_to_vmem [thread:$0]  %s0, 128, %s24, [#allocation5]
    $region5: #{tpu_custom_call.1} parent=1 // pred_fallthru
      _
    // Predicated region
    $region6: #{tpu_custom_call.1} parent=1 // pred_check
      _
    $region7: #{tpu_custom_call.1} parent=1 // pred_check_branch
      %28 = sbr.rel (0) target = $region9
    $region8: #{tpu_custom_call.1} parent=1 // pred_region
      %s30 = ssub.s32 6144, 6144
      %31 = vsyncadd [#allocation8], %s30
      %s32 = sshll.u32 [#allocation7], 4
      %s33 = int_to_ptr.vmem [resolvable:$true] %s32
      %38 = dma.hbm_to_vmem [thread:$0]  %s1, 6144, %s33, [#allocation8], 384, 384, 24
    $region9: #{tpu_custom_call.1} parent=1 // pred_fallthru
      _
    // Predicated region
    $region10: #{tpu_custom_call.1} parent=1 // pred_check
      _
    $region11: #{tpu_custom_call.1} parent=1 // pred_check_branch
      %40 = sbr.rel (0) target = $region13
    $region12: #{tpu_custom_call.1} parent=1 // pred_region
      _
    $region13: #{tpu_custom_call.1} parent=1 // pred_fallthru
      _
    // Predicated region
    $region14: #{tpu_custom_call.1} parent=1 // pred_check
      _
    $region15: #{tpu_custom_call.1} parent=1 // pred_check_branch
      %42 = sbr.rel (0) target = $region17
    $region16: #{tpu_custom_call.1} parent=1 // pred_region
      %s44 = ssub.s32 8192, 8192
      %45 = vsyncadd [#allocation8], %s44
      %s46 = sshll.u32 [#allocation9], 4
      %s47 = int_to_ptr.vmem [resolvable:$true] %s46
      %52 = dma.hbm_to_vmem [thread:$0]  %s3, 8192, %s47, [#allocation8], 512, 512, 32
    $region17: #{tpu_custom_call.1} parent=1 // pred_fallthru
      _
    // Predicated region
    $region18: #{tpu_custom_call.1} parent=1 // pred_check
      _
    $region19: #{tpu_custom_call.1} parent=1 // pred_check_branch
      %54 = sbr.rel (0) target = $region21
    $region20: #{tpu_custom_call.1} parent=1 // pred_region
      _
    $region21: #{tpu_custom_call.1} parent=1 // pred_fallthru
      _
    // Predicated region
    $region22: #{tpu_custom_call.1} parent=1 // pred_check
      _
    $region23: #{tpu_custom_call.1} parent=1 // pred_check_branch
      %56 = sbr.rel (0) target = $region25
    $region24: #{tpu_custom_call.1} parent=1 // pred_region
      _
    $region25: #{tpu_custom_call.1} parent=1 // pred_fallthru
      _
    // Predicated region
    $region26: #{tpu_custom_call.1} parent=1 // pred_check
      _
    $region27: #{tpu_custom_call.1} parent=1 // pred_check_branch
      %58 = sbr.rel (0) target = $region29
    $region28: #{tpu_custom_call.1} parent=1 // pred_region
      _
    $region29: #{tpu_custom_call.1} parent=1 // pred_fallthru
      _
    // Predicated region
    $region30: #{tpu_custom_call.1} parent=1 // pred_check
      _
    $region31: #{tpu_custom_call.1} parent=1 // pred_check_branch
      %60 = sbr.rel (0) target = $region33
    $region32: #{tpu_custom_call.1} parent=1 // pred_region
      %61 = dma.done [#allocation5], 128
    $region33: #{tpu_custom_call.1} parent=1 // pred_fallthru
      _
    // Predicated region
    $region34: #{tpu_custom_call.1} parent=1 // pred_check
      _
    $region35: #{tpu_custom_call.1} parent=1 // pred_check_branch
      %63 = sbr.rel (0) target = $region37
    $region36: #{tpu_custom_call.1} parent=1 // pred_region
      %64 = dma.done [#allocation8], 6144
    $region37: #{tpu_custom_call.1} parent=1 // pred_fallthru
      _
    // Predicated region
    $region38: #{tpu_custom_call.1} parent=1 // pred_check
      _
    $region39: #{tpu_custom_call.1} parent=1 // pred_check_branch
      %66 = sbr.rel (0) target = $region41
    $region40: #{tpu_custom_call.1} parent=1 // pred_region
      %67 = dma.done [#allocation8], 8192
    $region41: #{tpu_custom_call.1} parent=1 // pred_fallthru
      _
    %v68 = vld [vmem:[#allocation4] sm:$0xff]
    %v69 = vld [vmem:[#allocation7] sm:$0xff]
    %v70 = vld [vmem:[#allocation7 + $0x8] sm:$0xff]
    %v71 = vld [vmem:[#allocation7 + $0x10] sm:$0xff]
    %v72 = vld [vmem:[#allocation7 + $0x18] sm:$0xff]
    %v73 = vld [vmem:[#allocation7 + $0x20] sm:$0xff]
    %v74 = vld [vmem:[#allocation7 + $0x28] sm:$0xff]
    %v75 = vld [vmem:[#allocation7 + $0x30] sm:$0xff]
    %v76 = vld [vmem:[#allocation7 + $0x38] sm:$0xff]
    %v77 = vld [vmem:[#allocation7 + $0x40] sm:$0xff]
    %v78 = vld [vmem:[#allocation7 + $0x48] sm:$0xff]
    %v79 = vld [vmem:[#allocation7 + $0x50] sm:$0xff]
    %v80 = vld [vmem:[#allocation7 + $0x58] sm:$0xff]
    %v81 = vld [vmem:[#allocation7 + $0x60] sm:$0xff]
    %v82 = vld [vmem:[#allocation7 + $0x68] sm:$0xff]
    %v83 = vld [vmem:[#allocation7 + $0x70] sm:$0xff]
    %v84 = vld [vmem:[#allocation7 + $0x78] sm:$0xff]
    %v85 = vld [vmem:[#allocation7 + $0x80] sm:$0xff]
    %v86 = vld [vmem:[#allocation7 + $0x88] sm:$0xff]
    %v87 = vld [vmem:[#allocation7 + $0x90] sm:$0xff]
    %v88 = vld [vmem:[#allocation7 + $0x98] sm:$0xff]
    %v89 = vld [vmem:[#allocation7 + $0xa0] sm:$0xff]
    %v90 = vld [vmem:[#allocation7 + $0xa8] sm:$0xff]
    %v91 = vld [vmem:[#allocation7 + $0xb0] sm:$0xff]
    %v92 = vld [vmem:[#allocation7 + $0xb8] sm:$0xff]
    %v93 = vld [vmem:[#allocation7 + $0xc0] sm:$0xff]
    %v94 = vld [vmem:[#allocation7 + $0xc8] sm:$0xff]
    %v95 = vld [vmem:[#allocation7 + $0xd0] sm:$0xff]
    %v96 = vld [vmem:[#allocation7 + $0xd8] sm:$0xff]
    %v97 = vld [vmem:[#allocation7 + $0xe0] sm:$0xff]
    %v98 = vld [vmem:[#allocation7 + $0xe8] sm:$0xff]
    %v99 = vld [vmem:[#allocation7 + $0xf0] sm:$0xff]
    %v100 = vld [vmem:[#allocation7 + $0xf8] sm:$0xff]
    %v101 = vld [vmem:[#allocation7 + $0x100] sm:$0xff]
    %v102 = vld [vmem:[#allocation7 + $0x108] sm:$0xff]
    %v103 = vld [vmem:[#allocation7 + $0x110] sm:$0xff]
    %v104 = vld [vmem:[#allocation7 + $0x118] sm:$0xff]
    %v105 = vld [vmem:[#allocation7 + $0x120] sm:$0xff]
    %v106 = vld [vmem:[#allocation7 + $0x128] sm:$0xff]
    %v107 = vld [vmem:[#allocation7 + $0x130] sm:$0xff]
    %v108 = vld [vmem:[#allocation7 + $0x138] sm:$0xff]
    %v109 = vld [vmem:[#allocation7 + $0x140] sm:$0xff]
    %v110 = vld [vmem:[#allocation7 + $0x148] sm:$0xff]
    %v111 = vld [vmem:[#allocation7 + $0x150] sm:$0xff]
    %v112 = vld [vmem:[#allocation7 + $0x158] sm:$0xff]
    %v113 = vld [vmem:[#allocation7 + $0x160] sm:$0xff]
    %v114 = vld [vmem:[#allocation7 + $0x168] sm:$0xff]
    %v115 = vld [vmem:[#allocation7 + $0x170] sm:$0xff]
    %v116 = vld [vmem:[#allocation7 + $0x178] sm:$0xff]
    %v117 = vld [vmem:[%s2] sm:$0x7]
    %v119 = vlaneseq
    %v120 = vshrl.u32 %v119, 7
    %v121 = vsub.s32 0, %v120
    %v122 = vrot.slane %v117, %v121
    %v123 = vlaneseq
    %v124 = vshrl.u32 %v123, 7
    %v125 = vsub.s32 1, %v124
    %v126 = vrot.slane %v117, %v125
    %v127 = vlaneseq
    %v128 = vshrl.u32 %v127, 7
    %v129 = vsub.s32 2, %v128
    %v130 = vrot.slane %v117, %v129
    %134 = vmatprep.subr.mxu0 %v70
    %135 = vmatpush1.msra.mxu0 %v69
    %136 = vmatprep.subr.mxu0 %v73
    %137 = vmatpush1.msra.mxu0 %v72
    %138 = vmatprep.subr.mxu0 %v76
    %139 = vmatpush1.msra.mxu0 %v75
    %140 = vmatprep.subr.mxu0 %v79
    %141 = vmatpush1.msra.mxu0 %v78
    %142 = vmatprep.subr.mxu0 %v82
    %143 = vmatpush1.msra.mxu0 %v81
    %144 = vmatprep.subr.mxu0 %v85
    %145 = vmatpush1.msra.mxu0 %v84
    %146 = vmatprep.subr.mxu0 %v88
    %147 = vmatpush1.msra.mxu0 %v87
    %148 = vmatprep.subr.mxu0 %v91
    %149 = vmatpush1.msra.mxu0 %v90
    %150 = vmatprep.subr.mxu0 %v94
    %151 = vmatpush1.msra.mxu0 %v93
    %152 = vmatprep.subr.mxu0 %v97
    %153 = vmatpush1.msra.mxu0 %v96
    %154 = vmatprep.subr.mxu0 %v100
    %155 = vmatpush1.msra.mxu0 %v99
    %156 = vmatprep.subr.mxu0 %v103
    %157 = vmatpush1.msra.mxu0 %v102
    %158 = vmatprep.subr.mxu0 %v106
    %159 = vmatpush1.msra.mxu0 %v105
    %160 = vmatprep.subr.mxu0 %v109
    %161 = vmatpush1.msra.mxu0 %v108
    %162 = vmatprep.subr.mxu0 %v112
    %163 = vmatpush1.msra.mxu0 %v111
    %164 = vmatprep.subr.mxu0 %v115
    %165 = vmatpush1.msra.mxu0 %v114
    %166 = vmatprep.subr.mxu0 0.0
    %167 = vmatpush1.msra.mxu0 0.0
    %168 = vmatprep.subr.mxu0 0.0
    %169 = vmatpush1.msra.mxu0 0.0
    %170 = vmatprep.subr.mxu0 0.0
    %171 = vmatpush1.msra.mxu0 0.0
    %172 = vmatprep.subr.mxu0 0.0
    %173 = vmatpush1.msra.mxu0 0.0
    %174 = vmatprep.subr.mxu0 0.0
    %175 = vmatpush1.msra.mxu0 0.0
    %176 = vmatprep.subr.mxu0 0.0
    %177 = vmatpush1.msra.mxu0 0.0
    %178 = vmatprep.subr.mxu0 0.0
    %179 = vmatpush1.msra.mxu0 0.0
    %180 = vmatprep.subr.mxu0 0.0
    %181 = vmatpush1.msra.mxu0 0.0
    %182 = vmatprep.subr.mxu0 0.0
    %183 = vmatpush1.msra.mxu0 0.0
    %184 = vmatprep.subr.mxu0 0.0
    %185 = vmatpush1.msra.mxu0 0.0
    %186 = vmatprep.subr.mxu0 0.0
    %187 = vmatpush1.msra.mxu0 0.0
    %188 = vmatprep.subr.mxu0 0.0
    %189 = vmatpush1.msra.mxu0 0.0
    %190 = vmatprep.subr.mxu0 0.0
    %191 = vmatpush1.msra.mxu0 0.0
    %192 = vmatprep.subr.mxu0 0.0
    %193 = vmatpush1.msra.mxu0 0.0
    %194 = vmatprep.subr.mxu0 0.0
    %195 = vmatpush1.msra.mxu0 0.0
    %196 = vmatprep.subr.mxu0 0.0
    %197 = vmatpush1.msra.mxu0 0.0
    %198 = vmatprep.mubr.f32.mxu0 0.0
    %199 = vmatmul.mubr.f32.gmra.mrb[0].mxu0 %v68
    %v200 = vpop.f32.mrb[0].mxu0
    %v201 = vadd.f32 %v122, %v200
    %v202 = vpop.f32.mrb[0].mxu0
    %v203 = vadd.f32 %v126, %v202
    %204 = vdwg.mxu0
    %205 = vmatprep.subr.mxu0 0.0
    %206 = vmatpush1.msra.mxu0 %v71
    %207 = vmatprep.subr.mxu0 0.0
    %208 = vmatpush1.msra.mxu0 %v74
    %209 = vmatprep.subr.mxu0 0.0
    %210 = vmatpush1.msra.mxu0 %v77
    %211 = vmatprep.subr.mxu0 0.0
    %212 = vmatpush1.msra.mxu0 %v80
    %213 = vmatprep.subr.mxu0 0.0
    %214 = vmatpush1.msra.mxu0 %v83
    %215 = vmatprep.subr.mxu0 0.0
    %216 = vmatpush1.msra.mxu0 %v86
    %217 = vmatprep.subr.mxu0 0.0
    %218 = vmatpush1.msra.mxu0 %v89
    %219 = vmatprep.subr.mxu0 0.0
    %220 = vmatpush1.msra.mxu0 %v92
    %221 = vmatprep.subr.mxu0 0.0
    %222 = vmatpush1.msra.mxu0 %v95
    %223 = vmatprep.subr.mxu0 0.0
    %224 = vmatpush1.msra.mxu0 %v98
    %225 = vmatprep.subr.mxu0 0.0
    %226 = vmatpush1.msra.mxu0 %v101
    %227 = vmatprep.subr.mxu0 0.0
    %228 = vmatpush1.msra.mxu0 %v104
    %229 = vmatprep.subr.mxu0 0.0
    %230 = vmatpush1.msra.mxu0 %v107
    %231 = vmatprep.subr.mxu0 0.0
    %232 = vmatpush1.msra.mxu0 %v110
    %233 = vmatprep.subr.mxu0 0.0
    %234 = vmatpush1.msra.mxu0 %v113
    %235 = vmatprep.subr.mxu0 0.0
    %236 = vmatpush1.msra.mxu0 %v116
    %237 = vmatprep.subr.mxu0 0.0
    %238 = vmatpush1.msra.mxu0 0.0
    %239 = vmatprep.subr.mxu0 0.0
    %240 = vmatpush1.msra.mxu0 0.0
    %241 = vmatprep.subr.mxu0 0.0
    %242 = vmatpush1.msra.mxu0 0.0
    %243 = vmatprep.subr.mxu0 0.0
    %244 = vmatpush1.msra.mxu0 0.0
    %245 = vmatprep.subr.mxu0 0.0
    %246 = vmatpush1.msra.mxu0 0.0
    %247 = vmatprep.subr.mxu0 0.0
    %248 = vmatpush1.msra.mxu0 0.0
    %249 = vmatprep.subr.mxu0 0.0
    %250 = vmatpush1.msra.mxu0 0.0
    %251 = vmatprep.subr.mxu0 0.0
    %252 = vmatpush1.msra.mxu0 0.0
    %253 = vmatprep.subr.mxu0 0.0
    %254 = vmatpush1.msra.mxu0 0.0
    %255 = vmatprep.subr.mxu0 0.0
    %256 = vmatpush1.msra.mxu0 0.0
    %257 = vmatprep.subr.mxu0 0.0
    %258 = vmatpush1.msra.mxu0 0.0
    %259 = vmatprep.subr.mxu0 0.0
    %260 = vmatpush1.msra.mxu0 0.0
    %261 = vmatprep.subr.mxu0 0.0
    %262 = vmatpush1.msra.mxu0 0.0
    %263 = vmatprep.subr.mxu0 0.0
    %264 = vmatpush1.msra.mxu0 0.0
    %265 = vmatprep.subr.mxu0 0.0
    %266 = vmatpush1.msra.mxu0 0.0
    %267 = vmatprep.subr.mxu0 0.0
    %268 = vmatpush1.msra.mxu0 0.0
    %269 = vmatprep.mubr.f32.mxu0 0.0
    %270 = vmatmul.mubr.f32.gmra.mrb[0].mxu0 %v68
    %v271 = vpop.f32.mrb[0].mxu0
    %v272 = vadd.f32 %v130, %v271
    %v273 = vpop.f32.mrb[0].mxu0
    %274 = vdwg.mxu0
    %275 = vst [vmem:[#allocation2] sm:$0xff] %v201
    %276 = vst [vmem:[#allocation2 + $0x8] sm:$0xff] %v203
    %277 = vst [vmem:[#allocation2 + $0x10] sm:$0xff] %v272
    %v278 = vld [vmem:[#allocation9] sm:$0xff]
    %v279 = vld [vmem:[#allocation9 + $0x8] sm:$0xff]
    %v280 = vld [vmem:[#allocation9 + $0x10] sm:$0xff]
    %v281 = vld [vmem:[#allocation9 + $0x18] sm:$0xff]
    %v282 = vld [vmem:[#allocation9 + $0x20] sm:$0xff]
    %v283 = vld [vmem:[#allocation9 + $0x28] sm:$0xff]
    %v284 = vld [vmem:[#allocation9 + $0x30] sm:$0xff]
    %v285 = vld [vmem:[#allocation9 + $0x38] sm:$0xff]
    %v286 = vld [vmem:[#allocation9 + $0x40] sm:$0xff]
    %v287 = vld [vmem:[#allocation9 + $0x48] sm:$0xff]
    %v288 = vld [vmem:[#allocation9 + $0x50] sm:$0xff]
    %v289 = vld [vmem:[#allocation9 + $0x58] sm:$0xff]
    %v290 = vld [vmem:[#allocation9 + $0x60] sm:$0xff]
    %v291 = vld [vmem:[#allocation9 + $0x68] sm:$0xff]
    %v292 = vld [vmem:[#allocation9 + $0x70] sm:$0xff]
    %v293 = vld [vmem:[#allocation9 + $0x78] sm:$0xff]
    %v294 = vld [vmem:[#allocation9 + $0x80] sm:$0xff]
    %v295 = vld [vmem:[#allocation9 + $0x88] sm:$0xff]
    %v296 = vld [vmem:[#allocation9 + $0x90] sm:$0xff]
    %v297 = vld [vmem:[#allocation9 + $0x98] sm:$0xff]
    %v298 = vld [vmem:[#allocation9 + $0xa0] sm:$0xff]
    %v299 = vld [vmem:[#allocation9 + $0xa8] sm:$0xff]
    %v300 = vld [vmem:[#allocation9 + $0xb0] sm:$0xff]
    %v301 = vld [vmem:[#allocation9 + $0xb8] sm:$0xff]
    %v302 = vld [vmem:[#allocation9 + $0xc0] sm:$0xff]
    %v303 = vld [vmem:[#allocation9 + $0xc8] sm:$0xff]
    %v304 = vld [vmem:[#allocation9 + $0xd0] sm:$0xff]
    %v305 = vld [vmem:[#allocation9 + $0xd8] sm:$0xff]
    %v306 = vld [vmem:[#allocation9 + $0xe0] sm:$0xff]
    %v307 = vld [vmem:[#allocation9 + $0xe8] sm:$0xff]
    %v308 = vld [vmem:[#allocation9 + $0xf0] sm:$0xff]
    %v309 = vld [vmem:[#allocation9 + $0xf8] sm:$0xff]
    %v310 = vld [vmem:[#allocation9 + $0x100] sm:$0xff]
    %v311 = vld [vmem:[#allocation9 + $0x108] sm:$0xff]
    %v312 = vld [vmem:[#allocation9 + $0x110] sm:$0xff]
    %v313 = vld [vmem:[#allocation9 + $0x118] sm:$0xff]
    %v314 = vld [vmem:[#allocation9 + $0x120] sm:$0xff]
    %v315 = vld [vmem:[#allocation9 + $0x128] sm:$0xff]
    %v316 = vld [vmem:[#allocation9 + $0x130] sm:$0xff]
    %v317 = vld [vmem:[#allocation9 + $0x138] sm:$0xff]
    %v318 = vld [vmem:[#allocation9 + $0x140] sm:$0xff]
    %v319 = vld [vmem:[#allocation9 + $0x148] sm:$0xff]
    %v320 = vld [vmem:[#allocation9 + $0x150] sm:$0xff]
    %v321 = vld [vmem:[#allocation9 + $0x158] sm:$0xff]
    %v322 = vld [vmem:[#allocation9 + $0x160] sm:$0xff]
    %v323 = vld [vmem:[#allocation9 + $0x168] sm:$0xff]
    %v324 = vld [vmem:[#allocation9 + $0x170] sm:$0xff]
    %v325 = vld [vmem:[#allocation9 + $0x178] sm:$0xff]
    %v326 = vld [vmem:[#allocation9 + $0x180] sm:$0xff]
    %v327 = vld [vmem:[#allocation9 + $0x188] sm:$0xff]
    %v328 = vld [vmem:[#allocation9 + $0x190] sm:$0xff]
    %v329 = vld [vmem:[#allocation9 + $0x198] sm:$0xff]
    %v330 = vld [vmem:[#allocation9 + $0x1a0] sm:$0xff]
    %v331 = vld [vmem:[#allocation9 + $0x1a8] sm:$0xff]
    %v332 = vld [vmem:[#allocation9 + $0x1b0] sm:$0xff]
    %v333 = vld [vmem:[#allocation9 + $0x1b8] sm:$0xff]
    %v334 = vld [vmem:[#allocation9 + $0x1c0] sm:$0xff]
    %v335 = vld [vmem:[#allocation9 + $0x1c8] sm:$0xff]
    %v336 = vld [vmem:[#allocation9 + $0x1d0] sm:$0xff]
    %v337 = vld [vmem:[#allocation9 + $0x1d8] sm:$0xff]
    %v338 = vld [vmem:[#allocation9 + $0x1e0] sm:$0xff]
    %v339 = vld [vmem:[#allocation9 + $0x1e8] sm:$0xff]
    %v340 = vld [vmem:[#allocation9 + $0x1f0] sm:$0xff]
    %v341 = vld [vmem:[#allocation9 + $0x1f8] sm:$0xff]
    %v342 = vld [vmem:[%s4] sm:$0xf]
    %v343 = vlaneseq
    %v344 = vand.u32 %v343, 127
    %v346 = vlaneseq
    %v347 = vshrl.u32 %v346, 7
    %v348 = vsub.s32 0, %v347
    %v349 = vrot.slane %v342, %v348
    %v350 = vlaneseq
    %v351 = vshrl.u32 %v350, 7
    %v352 = vsub.s32 1, %v351
    %v353 = vrot.slane %v342, %v352
    %v354 = vlaneseq
    %v355 = vshrl.u32 %v354, 7
    %v356 = vsub.s32 2, %v355
    %v357 = vrot.slane %v342, %v356
    %v358 = vlaneseq
    %v359 = vshrl.u32 %v358, 7
    %v360 = vsub.s32 3, %v359
    %v361 = vrot.slane %v342, %v360
    %366 = vmatprep.subr.mxu0 %v279
    %367 = vmatpush1.msra.mxu0 %v278
    %368 = vmatprep.subr.mxu0 %v283
    %369 = vmatpush1.msra.mxu0 %v282
    %370 = vmatprep.subr.mxu0 %v287
    %371 = vmatpush1.msra.mxu0 %v286
    %372 = vmatprep.subr.mxu0 %v291
    %373 = vmatpush1.msra.mxu0 %v290
    %374 = vmatprep.subr.mxu0 %v295
    %375 = vmatpush1.msra.mxu0 %v294
    %376 = vmatprep.subr.mxu0 %v299
    %377 = vmatpush1.msra.mxu0 %v298
    %378 = vmatprep.subr.mxu0 %v303
    %379 = vmatpush1.msra.mxu0 %v302
    %380 = vmatprep.subr.mxu0 %v307
    %381 = vmatpush1.msra.mxu0 %v306
    %382 = vmatprep.subr.mxu0 %v311
    %383 = vmatpush1.msra.mxu0 %v310
    %384 = vmatprep.subr.mxu0 %v315
    %385 = vmatpush1.msra.mxu0 %v314
    %386 = vmatprep.subr.mxu0 %v319
    %387 = vmatpush1.msra.mxu0 %v318
    %388 = vmatprep.subr.mxu0 %v323
    %389 = vmatpush1.msra.mxu0 %v322
    %390 = vmatprep.subr.mxu0 %v327
    %391 = vmatpush1.msra.mxu0 %v326
    %392 = vmatprep.subr.mxu0 %v331
    %393 = vmatpush1.msra.mxu0 %v330
    %394 = vmatprep.subr.mxu0 %v335
    %395 = vmatpush1.msra.mxu0 %v334
    %396 = vmatprep.subr.mxu0 %v339
    %397 = vmatpush1.msra.mxu0 %v338
    %398 = vmatprep.subr.mxu0 0.0
    %399 = vmatpush1.msra.mxu0 0.0
    %400 = vmatprep.subr.mxu0 0.0
    %401 = vmatpush1.msra.mxu0 0.0
    %402 = vmatprep.subr.mxu0 0.0
    %403 = vmatpush1.msra.mxu0 0.0
    %404 = vmatprep.subr.mxu0 0.0
    %405 = vmatpush1.msra.mxu0 0.0
    %406 = vmatprep.subr.mxu0 0.0
    %407 = vmatpush1.msra.mxu0 0.0
    %408 = vmatprep.subr.mxu0 0.0
    %409 = vmatpush1.msra.mxu0 0.0
    %410 = vmatprep.subr.mxu0 0.0
    %411 = vmatpush1.msra.mxu0 0.0
    %412 = vmatprep.subr.mxu0 0.0
    %413 = vmatpush1.msra.mxu0 0.0
    %414 = vmatprep.subr.mxu0 0.0
    %415 = vmatpush1.msra.mxu0 0.0
    %416 = vmatprep.subr.mxu0 0.0
    %417 = vmatpush1.msra.mxu0 0.0
    %418 = vmatprep.subr.mxu0 0.0
    %419 = vmatpush1.msra.mxu0 0.0
    %420 = vmatprep.subr.mxu0 0.0
    %421 = vmatpush1.msra.mxu0 0.0
    %422 = vmatprep.subr.mxu0 0.0
    %423 = vmatpush1.msra.mxu0 0.0
    %424 = vmatprep.subr.mxu0 0.0
    %425 = vmatpush1.msra.mxu0 0.0
    %426 = vmatprep.subr.mxu0 0.0
    %427 = vmatpush1.msra.mxu0 0.0
    %428 = vmatprep.subr.mxu0 0.0
    %429 = vmatpush1.msra.mxu0 0.0
    %430 = vmatprep.mubr.f32.mxu0 0.0
    %431 = vmatmul.mubr.f32.gmra.mrb[0].mxu0 0.0
    %v432 = vpop.f32.mrb[0].mxu0
    %v433 = vadd.f32 %v349, %v432
    %v434 = vpop.f32.mrb[0].mxu0
    %v435 = vadd.f32 %v353, %v434
    %436 = vdwg.mxu0
    %437 = vmatprep.subr.mxu0 %v281
    %438 = vmatpush1.msra.mxu0 %v280
    %439 = vmatprep.subr.mxu0 %v285
    %440 = vmatpush1.msra.mxu0 %v284
    %441 = vmatprep.subr.mxu0 %v289
    %442 = vmatpush1.msra.mxu0 %v288
    %443 = vmatprep.subr.mxu0 %v293
    %444 = vmatpush1.msra.mxu0 %v292
    %445 = vmatprep.subr.mxu0 %v297
    %446 = vmatpush1.msra.mxu0 %v296
    %447 = vmatprep.subr.mxu0 %v301
    %448 = vmatpush1.msra.mxu0 %v300
    %449 = vmatprep.subr.mxu0 %v305
    %450 = vmatpush1.msra.mxu0 %v304
    %451 = vmatprep.subr.mxu0 %v309
    %452 = vmatpush1.msra.mxu0 %v308
    %453 = vmatprep.subr.mxu0 %v313
    %454 = vmatpush1.msra.mxu0 %v312
    %455 = vmatprep.subr.mxu0 %v317
    %456 = vmatpush1.msra.mxu0 %v316
    %457 = vmatprep.subr.mxu0 %v321
    %458 = vmatpush1.msra.mxu0 %v320
    %459 = vmatprep.subr.mxu0 %v325
    %460 = vmatpush1.msra.mxu0 %v324
    %461 = vmatprep.subr.mxu0 %v329
    %462 = vmatpush1.msra.mxu0 %v328
    %463 = vmatprep.subr.mxu0 %v333
    %464 = vmatpush1.msra.mxu0 %v332
    %465 = vmatprep.subr.mxu0 %v337
    %466 = vmatpush1.msra.mxu0 %v336
    %467 = vmatprep.subr.mxu0 %v341
    %468 = vmatpush1.msra.mxu0 %v340
    %469 = vmatprep.subr.mxu0 0.0
    %470 = vmatpush1.msra.mxu0 0.0
    %471 = vmatprep.subr.mxu0 0.0
    %472 = vmatpush1.msra.mxu0 0.0
    %473 = vmatprep.subr.mxu0 0.0
    %474 = vmatpush1.msra.mxu0 0.0
    %475 = vmatprep.subr.mxu0 0.0
    %476 = vmatpush1.msra.mxu0 0.0
    %477 = vmatprep.subr.mxu0 0.0
    %478 = vmatpush1.msra.mxu0 0.0
    %479 = vmatprep.subr.mxu0 0.0
    %480 = vmatpush1.msra.mxu0 0.0
    %481 = vmatprep.subr.mxu0 0.0
    %482 = vmatpush1.msra.mxu0 0.0
    %483 = vmatprep.subr.mxu0 0.0
    %484 = vmatpush1.msra.mxu0 0.0
    %485 = vmatprep.subr.mxu0 0.0
    %486 = vmatpush1.msra.mxu0 0.0
    %487 = vmatprep.subr.mxu0 0.0
    %488 = vmatpush1.msra.mxu0 0.0
    %489 = vmatprep.subr.mxu0 0.0
    %490 = vmatpush1.msra.mxu0 0.0
    %491 = vmatprep.subr.mxu0 0.0
    %492 = vmatpush1.msra.mxu0 0.0
    %493 = vmatprep.subr.mxu0 0.0
    %494 = vmatpush1.msra.mxu0 0.0
    %495 = vmatprep.subr.mxu0 0.0
    %496 = vmatpush1.msra.mxu0 0.0
    %497 = vmatprep.subr.mxu0 0.0
    %498 = vmatpush1.msra.mxu0 0.0
    %499 = vmatprep.subr.mxu0 0.0
    %500 = vmatpush1.msra.mxu0 0.0
    %501 = vmatprep.mubr.f32.mxu0 0.0
    %502 = vmatmul.mubr.f32.gmra.mrb[0].mxu0 0.0
    %v503 = vpop.f32.mrb[0].mxu0
    %v504 = vadd.f32 %v357, %v503
    %v505 = vpop.f32.mrb[0].mxu0
    %v506 = vadd.f32 %v361, %v505
    %507 = vdwg.mxu0
    %v508 = vld [vmem:[#allocation2] ss:$8 sm:$0x7]
    %v509 = vadd.f32 %v433, %v508
    %v510 = vxor.u32 %v509, 2147483648
    %v511 = vmul.f32 %v510, 1.442695
    %v512 = vpow.pop %v511
    %v513 = vadd.f32 %v512, 1.0
    %v514 = vrcp.pop %v513
    %v515 = vmul.f32 1.0, %v514
    %v517 = vlaneseq
    %v518 = vshrl.u32 %v517, 7
    %v519 = vsub.s32 1, %v518
    %v520 = vrot.slane %v508, %v519
    %v522 = vadd.f32 %v435, %v520
    %v523 = vxor.u32 %v522, 2147483648
    %v524 = vmul.f32 %v523, 1.442695
    %v525 = vpow.pop %v524
    %v526 = vadd.f32 %v525, 1.0
    %v527 = vrcp.pop %v526
    %v528 = vmul.f32 1.0, %v527
    %v529 = vlaneseq
    %v530 = vshrl.u32 %v529, 7
    %v531 = vsub.s32 2, %v530
    %v532 = vrot.slane %v508, %v531
    %v534 = vadd.f32 %v504, %v532
    %v535 = vmul.f32 %v515, %v506
    %v536 = vadd.f32 %v534, %v535
    %v537 = vtanh.pop %v536
    %v538 = vsub.f32 1.0, %v528
    %v539 = vmul.f32 %v538, %v537
    %v540 = vmul.f32 %v528, 0.0
    %v541 = vadd.f32 %v539, %v540
    %vm542 = vcmp.ge.s32.totalorder %v344, 0
    %vm543 = vcmp.lt.s32.totalorder %v344, 32
    %vm544 = vmand %vm542, %vm543
    %v545 = vsel %vm544, %v541, 0.0
    %546 = vmatprep.subr.mxu0 %v279
    %547 = vmatpush1.msra.mxu0 %v278
    %548 = vmatprep.subr.mxu0 %v283
    %549 = vmatpush1.msra.mxu0 %v282
    %550 = vmatprep.subr.mxu0 %v287
    %551 = vmatpush1.msra.mxu0 %v286
    %552 = vmatprep.subr.mxu0 %v291
    %553 = vmatpush1.msra.mxu0 %v290
    %554 = vmatprep.subr.mxu0 %v295
    %555 = vmatpush1.msra.mxu0 %v294
    %556 = vmatprep.subr.mxu0 %v299
    %557 = vmatpush1.msra.mxu0 %v298
    %558 = vmatprep.subr.mxu0 %v303
    %559 = vmatpush1.msra.mxu0 %v302
    %560 = vmatprep.subr.mxu0 %v307
    %561 = vmatpush1.msra.mxu0 %v306
    %562 = vmatprep.subr.mxu0 %v311
    %563 = vmatpush1.msra.mxu0 %v310
    %564 = vmatprep.subr.mxu0 %v315
    %565 = vmatpush1.msra.mxu0 %v314
    %566 = vmatprep.subr.mxu0 %v319
    %567 = vmatpush1.msra.mxu0 %v318
    %568 = vmatprep.subr.mxu0 %v323
    %569 = vmatpush1.msra.mxu0 %v322
    %570 = vmatprep.subr.mxu0 %v327
    %571 = vmatpush1.msra.mxu0 %v326
    %572 = vmatprep.subr.mxu0 %v331
    %573 = vmatpush1.msra.mxu0 %v330
    %574 = vmatprep.subr.mxu0 %v335
    %575 = vmatpush1.msra.mxu0 %v334
    %576 = vmatprep.subr.mxu0 %v339
    %577 = vmatpush1.msra.mxu0 %v338
    %578 = vmatprep.subr.mxu0 0.0
    %579 = vmatpush1.msra.mxu0 0.0
    %580 = vmatprep.subr.mxu0 0.0
    %581 = vmatpush1.msra.mxu0 0.0
    %582 = vmatprep.subr.mxu0 0.0
    %583 = vmatpush1.msra.mxu0 0.0
    %584 = vmatprep.subr.mxu0 0.0
    %585 = vmatpush1.msra.mxu0 0.0
    %586 = vmatprep.subr.mxu0 0.0
    %587 = vmatpush1.msra.mxu0 0.0
    %588 = vmatprep.subr.mxu0 0.0
    %589 = vmatpush1.msra.mxu0 0.0
    %590 = vmatprep.subr.mxu0 0.0
    %591 = vmatpush1.msra.mxu0 0.0
    %592 = vmatprep.subr.mxu0 0.0
    %593 = vmatpush1.msra.mxu0 0.0
    %594 = vmatprep.subr.mxu0 0.0
    %595 = vmatpush1.msra.mxu0 0.0
    %596 = vmatprep.subr.mxu0 0.0
    %597 = vmatpush1.msra.mxu0 0.0
    %598 = vmatprep.subr.mxu0 0.0
    %599 = vmatpush1.msra.mxu0 0.0
    %600 = vmatprep.subr.mxu0 0.0
    %601 = vmatpush1.msra.mxu0 0.0
    %602 = vmatprep.subr.mxu0 0.0
    %603 = vmatpush1.msra.mxu0 0.0
    %604 = vmatprep.subr.mxu0 0.0
    %605 = vmatpush1.msra.mxu0 0.0
    %606 = vmatprep.subr.mxu0 0.0
    %607 = vmatpush1.msra.mxu0 0.0
    %608 = vmatprep.subr.mxu0 0.0
    %609 = vmatpush1.msra.mxu0 0.0
    %610 = vmatprep.mubr.f32.mxu0 0.0
    %611 = vmatmul.mubr.f32.gmra.mrb[0].mxu0 %v545
    %v612 = vpop.f32.mrb[0].mxu0
    %v613 = vadd.f32 %v349, %v612
    %v614 = vpop.f32.mrb[0].mxu0
    %v615 = vadd.f32 %v353, %v614
    %616 = vdwg.mxu0
    %617 = vmatprep.subr.mxu0 %v281
    %618 = vmatpush1.msra.mxu0 %v280
    %619 = vmatprep.subr.mxu0 %v285
    %620 = vmatpush1.msra.mxu0 %v284
    %621 = vmatprep.subr.mxu0 %v289
    %622 = vmatpush1.msra.mxu0 %v288
    %623 = vmatprep.subr.mxu0 %v293
    %624 = vmatpush1.msra.mxu0 %v292
    %625 = vmatprep.subr.mxu0 %v297
    %626 = vmatpush1.msra.mxu0 %v296
    %627 = vmatprep.subr.mxu0 %v301
    %628 = vmatpush1.msra.mxu0 %v300
    %629 = vmatprep.subr.mxu0 %v305
    %630 = vmatpush1.msra.mxu0 %v304
    %631 = vmatprep.subr.mxu0 %v309
    %632 = vmatpush1.msra.mxu0 %v308
    %633 = vmatprep.subr.mxu0 %v313
    %634 = vmatpush1.msra.mxu0 %v312
    %635 = vmatprep.subr.mxu0 %v317
    %636 = vmatpush1.msra.mxu0 %v316
    %637 = vmatprep.subr.mxu0 %v321
    %638 = vmatpush1.msra.mxu0 %v320
    %639 = vmatprep.subr.mxu0 %v325
    %640 = vmatpush1.msra.mxu0 %v324
    %641 = vmatprep.subr.mxu0 %v329
    %642 = vmatpush1.msra.mxu0 %v328
    %643 = vmatprep.subr.mxu0 %v333
    %644 = vmatpush1.msra.mxu0 %v332
    %645 = vmatprep.subr.mxu0 %v337
    %646 = vmatpush1.msra.mxu0 %v336
    %647 = vmatprep.subr.mxu0 %v341
    %648 = vmatpush1.msra.mxu0 %v340
    %649 = vmatprep.subr.mxu0 0.0
    %650 = vmatpush1.msra.mxu0 0.0
    %651 = vmatprep.subr.mxu0 0.0
    %652 = vmatpush1.msra.mxu0 0.0
    %653 = vmatprep.subr.mxu0 0.0
    %654 = vmatpush1.msra.mxu0 0.0
    %655 = vmatprep.subr.mxu0 0.0
    %656 = vmatpush1.msra.mxu0 0.0
    %657 = vmatprep.subr.mxu0 0.0
    %658 = vmatpush1.msra.mxu0 0.0
    %659 = vmatprep.subr.mxu0 0.0
    %660 = vmatpush1.msra.mxu0 0.0
    %661 = vmatprep.subr.mxu0 0.0
    %662 = vmatpush1.msra.mxu0 0.0
    %663 = vmatprep.subr.mxu0 0.0
    %664 = vmatpush1.msra.mxu0 0.0
    %665 = vmatprep.subr.mxu0 0.0
    %666 = vmatpush1.msra.mxu0 0.0
    %667 = vmatprep.subr.mxu0 0.0
    %668 = vmatpush1.msra.mxu0 0.0
    %669 = vmatprep.subr.mxu0 0.0
    %670 = vmatpush1.msra.mxu0 0.0
    %671 = vmatprep.subr.mxu0 0.0
    %672 = vmatpush1.msra.mxu0 0.0
    %673 = vmatprep.subr.mxu0 0.0
    %674 = vmatpush1.msra.mxu0 0.0
    %675 = vmatprep.subr.mxu0 0.0
    %676 = vmatpush1.msra.mxu0 0.0
    %677 = vmatprep.subr.mxu0 0.0
    %678 = vmatpush1.msra.mxu0 0.0
    %679 = vmatprep.subr.mxu0 0.0
    %680 = vmatpush1.msra.mxu0 0.0
    %681 = vmatprep.mubr.f32.mxu0 0.0
    %682 = vmatmul.mubr.f32.gmra.mrb[0].mxu0 %v545
    %v683 = vpop.f32.mrb[0].mxu0
    %v684 = vadd.f32 %v357, %v683
    %v685 = vpop.f32.mrb[0].mxu0
    %v686 = vadd.f32 %v361, %v685
    %687 = vdwg.mxu0
    %s688 = scalar_lea.vmem [#allocation2], 1
    %v689 = vld [vmem:[%s688] ss:$8 sm:$0x7]
    %v690 = vadd.f32 %v613, %v689
    %v691 = vxor.u32 %v690, 2147483648
    %v692 = vmul.f32 %v691, 1.442695
    %v693 = vpow.pop %v692
    %v694 = vadd.f32 %v693, 1.0
    %v695 = vrcp.pop %v694
    %v696 = vmul.f32 1.0, %v695
    %v698 = vlaneseq
    %v699 = vshrl.u32 %v698, 7
    %v700 = vsub.s32 1, %v699
    %v701 = vrot.slane %v689, %v700
    %v703 = vadd.f32 %v615, %v701
    %v704 = vxor.u32 %v703, 2147483648
    %v705 = vmul.f32 %v704, 1.442695
    %v706 = vpow.pop %v705
    %v707 = vadd.f32 %v706, 1.0
    %v708 = vrcp.pop %v707
    %v709 = vmul.f32 1.0, %v708
    %v710 = vlaneseq
    %v711 = vshrl.u32 %v710, 7
    %v712 = vsub.s32 2, %v711
    %v713 = vrot.slane %v689, %v712
    %v715 = vadd.f32 %v684, %v713
    %v716 = vmul.f32 %v696, %v686
    %v717 = vadd.f32 %v715, %v716
    %v718 = vtanh.pop %v717
    %v719 = vsub.f32 1.0, %v709
    %v720 = vmul.f32 %v719, %v718
    %v721 = vmul.f32 %v709, %v545
    %v722 = vadd.f32 %v720, %v721
    %v723 = vmax.f32 %v722, 0.0
    %v724 = vadd.f32 %v723, 0.0
    %725 = vmatprep.subr.mxu0 %v279
    %726 = vmatpush1.msra.mxu0 %v278
    %727 = vmatprep.subr.mxu0 %v283
    %728 = vmatpush1.msra.mxu0 %v282
    %729 = vmatprep.subr.mxu0 %v287
    %730 = vmatpush1.msra.mxu0 %v286
    %731 = vmatprep.subr.mxu0 %v291
    %732 = vmatpush1.msra.mxu0 %v290
    %733 = vmatprep.subr.mxu0 %v295
    %734 = vmatpush1.msra.mxu0 %v294
    %735 = vmatprep.subr.mxu0 %v299
    %736 = vmatpush1.msra.mxu0 %v298
    %737 = vmatprep.subr.mxu0 %v303
    %738 = vmatpush1.msra.mxu0 %v302
    %739 = vmatprep.subr.mxu0 %v307
    %740 = vmatpush1.msra.mxu0 %v306
    %741 = vmatprep.subr.mxu0 %v311
    %742 = vmatpush1.msra.mxu0 %v310
    %743 = vmatprep.subr.mxu0 %v315
    %744 = vmatpush1.msra.mxu0 %v314
    %745 = vmatprep.subr.mxu0 %v319
    %746 = vmatpush1.msra.mxu0 %v318
    %747 = vmatprep.subr.mxu0 %v323
    %748 = vmatpush1.msra.mxu0 %v322
    %749 = vmatprep.subr.mxu0 %v327
    %750 = vmatpush1.msra.mxu0 %v326
    %751 = vmatprep.subr.mxu0 %v331
    %752 = vmatpush1.msra.mxu0 %v330
    %753 = vmatprep.subr.mxu0 %v335
    %754 = vmatpush1.msra.mxu0 %v334
    %755 = vmatprep.subr.mxu0 %v339
    %756 = vmatpush1.msra.mxu0 %v338
    %757 = vmatprep.subr.mxu0 0.0
    %758 = vmatpush1.msra.mxu0 0.0
    %759 = vmatprep.subr.mxu0 0.0
    %760 = vmatpush1.msra.mxu0 0.0
    %761 = vmatprep.subr.mxu0 0.0
    %762 = vmatpush1.msra.mxu0 0.0
    %763 = vmatprep.subr.mxu0 0.0
    %764 = vmatpush1.msra.mxu0 0.0
    %765 = vmatprep.subr.mxu0 0.0
    %766 = vmatpush1.msra.mxu0 0.0
    %767 = vmatprep.subr.mxu0 0.0
    %768 = vmatpush1.msra.mxu0 0.0
    %769 = vmatprep.subr.mxu0 0.0
    %770 = vmatpush1.msra.mxu0 0.0
    %771 = vmatprep.subr.mxu0 0.0
    %772 = vmatpush1.msra.mxu0 0.0
    %773 = vmatprep.subr.mxu0 0.0
    %774 = vmatpush1.msra.mxu0 0.0
    %775 = vmatprep.subr.mxu0 0.0
    %776 = vmatpush1.msra.mxu0 0.0
    %777 = vmatprep.subr.mxu0 0.0
    %778 = vmatpush1.msra.mxu0 0.0
    %779 = vmatprep.subr.mxu0 0.0
    %780 = vmatpush1.msra.mxu0 0.0
    %781 = vmatprep.subr.mxu0 0.0
    %782 = vmatpush1.msra.mxu0 0.0
    %783 = vmatprep.subr.mxu0 0.0
    %784 = vmatpush1.msra.mxu0 0.0
    %785 = vmatprep.subr.mxu0 0.0
    %786 = vmatpush1.msra.mxu0 0.0
    %787 = vmatprep.subr.mxu0 0.0
    %788 = vmatpush1.msra.mxu0 0.0
    %789 = vmatprep.mubr.f32.mxu0 0.0
    %790 = vmatmul.mubr.f32.gmra.mrb[0].mxu0 %v722
    %v791 = vpop.f32.mrb[0].mxu0
    %v792 = vadd.f32 %v349, %v791
    %v793 = vpop.f32.mrb[0].mxu0
    %v794 = vadd.f32 %v353, %v793
    %795 = vdwg.mxu0
    %796 = vmatprep.subr.mxu0 %v281
    %797 = vmatpush1.msra.mxu0 %v280
    %798 = vmatprep.subr.mxu0 %v285
    %799 = vmatpush1.msra.mxu0 %v284
    %800 = vmatprep.subr.mxu0 %v289
    %801 = vmatpush1.msra.mxu0 %v288
    %802 = vmatprep.subr.mxu0 %v293
    %803 = vmatpush1.msra.mxu0 %v292
    %804 = vmatprep.subr.mxu0 %v297
    %805 = vmatpush1.msra.mxu0 %v296
    %806 = vmatprep.subr.mxu0 %v301
    %807 = vmatpush1.msra.mxu0 %v300
    %808 = vmatprep.subr.mxu0 %v305
    %809 = vmatpush1.msra.mxu0 %v304
    %810 = vmatprep.subr.mxu0 %v309
    %811 = vmatpush1.msra.mxu0 %v308
    %812 = vmatprep.subr.mxu0 %v313
    %813 = vmatpush1.msra.mxu0 %v312
    %814 = vmatprep.subr.mxu0 %v317
    %815 = vmatpush1.msra.mxu0 %v316
    %816 = vmatprep.subr.mxu0 %v321
    %817 = vmatpush1.msra.mxu0 %v320
    %818 = vmatprep.subr.mxu0 %v325
    %819 = vmatpush1.msra.mxu0 %v324
    %820 = vmatprep.subr.mxu0 %v329
    %821 = vmatpush1.msra.mxu0 %v328
    %822 = vmatprep.subr.mxu0 %v333
    %823 = vmatpush1.msra.mxu0 %v332
    %824 = vmatprep.subr.mxu0 %v337
    %825 = vmatpush1.msra.mxu0 %v336
    %826 = vmatprep.subr.mxu0 %v341
    %827 = vmatpush1.msra.mxu0 %v340
    %828 = vmatprep.subr.mxu0 0.0
    %829 = vmatpush1.msra.mxu0 0.0
    %830 = vmatprep.subr.mxu0 0.0
    %831 = vmatpush1.msra.mxu0 0.0
    %832 = vmatprep.subr.mxu0 0.0
    %833 = vmatpush1.msra.mxu0 0.0
    %834 = vmatprep.subr.mxu0 0.0
    %835 = vmatpush1.msra.mxu0 0.0
    %836 = vmatprep.subr.mxu0 0.0
    %837 = vmatpush1.msra.mxu0 0.0
    %838 = vmatprep.subr.mxu0 0.0
    %839 = vmatpush1.msra.mxu0 0.0
    %840 = vmatprep.subr.mxu0 0.0
    %841 = vmatpush1.msra.mxu0 0.0
    %842 = vmatprep.subr.mxu0 0.0
    %843 = vmatpush1.msra.mxu0 0.0
    %844 = vmatprep.subr.mxu0 0.0
    %845 = vmatpush1.msra.mxu0 0.0
    %846 = vmatprep.subr.mxu0 0.0
    %847 = vmatpush1.msra.mxu0 0.0
    %848 = vmatprep.subr.mxu0 0.0
    %849 = vmatpush1.msra.mxu0 0.0
    %850 = vmatprep.subr.mxu0 0.0
    %851 = vmatpush1.msra.mxu0 0.0
    %852 = vmatprep.subr.mxu0 0.0
    %853 = vmatpush1.msra.mxu0 0.0
    %854 = vmatprep.subr.mxu0 0.0
    %855 = vmatpush1.msra.mxu0 0.0
    %856 = vmatprep.subr.mxu0 0.0
    %857 = vmatpush1.msra.mxu0 0.0
    %858 = vmatprep.subr.mxu0 0.0
    %859 = vmatpush1.msra.mxu0 0.0
    %860 = vmatprep.mubr.f32.mxu0 0.0
    %861 = vmatmul.mubr.f32.gmra.mrb[0].mxu0 %v722
    %v862 = vpop.f32.mrb[0].mxu0
    %v863 = vadd.f32 %v357, %v862
    %v864 = vpop.f32.mrb[0].mxu0
    %v865 = vadd.f32 %v361, %v864
    %866 = vdwg.mxu0
    %s867 = scalar_lea.vmem [#allocation2], 2
    %v868 = vld [vmem:[%s867] ss:$8 sm:$0x7]
    %v869 = vadd.f32 %v792, %v868
    %v870 = vxor.u32 %v869, 2147483648
    %v871 = vmul.f32 %v870, 1.442695
    %v872 = vpow.pop %v871
    %v873 = vadd.f32 %v872, 1.0
    %v874 = vrcp.pop %v873
    %v875 = vmul.f32 1.0, %v874
    %v877 = vlaneseq
    %v878 = vshrl.u32 %v877, 7
    %v879 = vsub.s32 1, %v878
    %v880 = vrot.slane %v868, %v879
    %v882 = vadd.f32 %v794, %v880
    %v883 = vxor.u32 %v882, 2147483648
    %v884 = vmul.f32 %v883, 1.442695
    %v885 = vpow.pop %v884
    %v886 = vadd.f32 %v885, 1.0
    %v887 = vrcp.pop %v886
    %v888 = vmul.f32 1.0, %v887
    %v889 = vlaneseq
    %v890 = vshrl.u32 %v889, 7
    %v891 = vsub.s32 2, %v890
    %v892 = vrot.slane %v868, %v891
    %v894 = vadd.f32 %v863, %v892
    %v895 = vmul.f32 %v875, %v865
    %v896 = vadd.f32 %v894, %v895
    %v897 = vtanh.pop %v896
    %v898 = vsub.f32 1.0, %v888
    %v899 = vmul.f32 %v898, %v897
    %v900 = vmul.f32 %v888, %v722
    %v901 = vadd.f32 %v899, %v900
    %v902 = vmax.f32 %v901, 0.0
    %v903 = vadd.f32 %v724, %v902
    %904 = vmatprep.subr.mxu0 %v279
    %905 = vmatpush1.msra.mxu0 %v278
    %906 = vmatprep.subr.mxu0 %v283
    %907 = vmatpush1.msra.mxu0 %v282
    %908 = vmatprep.subr.mxu0 %v287
    %909 = vmatpush1.msra.mxu0 %v286
    %910 = vmatprep.subr.mxu0 %v291
    %911 = vmatpush1.msra.mxu0 %v290
    %912 = vmatprep.subr.mxu0 %v295
    %913 = vmatpush1.msra.mxu0 %v294
    %914 = vmatprep.subr.mxu0 %v299
    %915 = vmatpush1.msra.mxu0 %v298
    %916 = vmatprep.subr.mxu0 %v303
    %917 = vmatpush1.msra.mxu0 %v302
    %918 = vmatprep.subr.mxu0 %v307
    %919 = vmatpush1.msra.mxu0 %v306
    %920 = vmatprep.subr.mxu0 %v311
    %921 = vmatpush1.msra.mxu0 %v310
    %922 = vmatprep.subr.mxu0 %v315
    %923 = vmatpush1.msra.mxu0 %v314
    %924 = vmatprep.subr.mxu0 %v319
    %925 = vmatpush1.msra.mxu0 %v318
    %926 = vmatprep.subr.mxu0 %v323
    %927 = vmatpush1.msra.mxu0 %v322
    %928 = vmatprep.subr.mxu0 %v327
    %929 = vmatpush1.msra.mxu0 %v326
    %930 = vmatprep.subr.mxu0 %v331
    %931 = vmatpush1.msra.mxu0 %v330
    %932 = vmatprep.subr.mxu0 %v335
    %933 = vmatpush1.msra.mxu0 %v334
    %934 = vmatprep.subr.mxu0 %v339
    %935 = vmatpush1.msra.mxu0 %v338
    %936 = vmatprep.subr.mxu0 0.0
    %937 = vmatpush1.msra.mxu0 0.0
    %938 = vmatprep.subr.mxu0 0.0
    %939 = vmatpush1.msra.mxu0 0.0
    %940 = vmatprep.subr.mxu0 0.0
    %941 = vmatpush1.msra.mxu0 0.0
    %942 = vmatprep.subr.mxu0 0.0
    %943 = vmatpush1.msra.mxu0 0.0
    %944 = vmatprep.subr.mxu0 0.0
    %945 = vmatpush1.msra.mxu0 0.0
    %946 = vmatprep.subr.mxu0 0.0
    %947 = vmatpush1.msra.mxu0 0.0
    %948 = vmatprep.subr.mxu0 0.0
    %949 = vmatpush1.msra.mxu0 0.0
    %950 = vmatprep.subr.mxu0 0.0
    %951 = vmatpush1.msra.mxu0 0.0
    %952 = vmatprep.subr.mxu0 0.0
    %953 = vmatpush1.msra.mxu0 0.0
    %954 = vmatprep.subr.mxu0 0.0
    %955 = vmatpush1.msra.mxu0 0.0
    %956 = vmatprep.subr.mxu0 0.0
    %957 = vmatpush1.msra.mxu0 0.0
    %958 = vmatprep.subr.mxu0 0.0
    %959 = vmatpush1.msra.mxu0 0.0
    %960 = vmatprep.subr.mxu0 0.0
    %961 = vmatpush1.msra.mxu0 0.0
    %962 = vmatprep.subr.mxu0 0.0
    %963 = vmatpush1.msra.mxu0 0.0
    %964 = vmatprep.subr.mxu0 0.0
    %965 = vmatpush1.msra.mxu0 0.0
    %966 = vmatprep.subr.mxu0 0.0
    %967 = vmatpush1.msra.mxu0 0.0
    %968 = vmatprep.mubr.f32.mxu0 0.0
    %969 = vmatmul.mubr.f32.gmra.mrb[0].mxu0 %v901
    %v970 = vpop.f32.mrb[0].mxu0
    %v971 = vadd.f32 %v349, %v970
    %v972 = vpop.f32.mrb[0].mxu0
    %v973 = vadd.f32 %v353, %v972
    %974 = vdwg.mxu0
    %975 = vmatprep.subr.mxu0 %v281
    %976 = vmatpush1.msra.mxu0 %v280
    %977 = vmatprep.subr.mxu0 %v285
    %978 = vmatpush1.msra.mxu0 %v284
    %979 = vmatprep.subr.mxu0 %v289
    %980 = vmatpush1.msra.mxu0 %v288
    %981 = vmatprep.subr.mxu0 %v293
    %982 = vmatpush1.msra.mxu0 %v292
    %983 = vmatprep.subr.mxu0 %v297
    %984 = vmatpush1.msra.mxu0 %v296
    %985 = vmatprep.subr.mxu0 %v301
    %986 = vmatpush1.msra.mxu0 %v300
    %987 = vmatprep.subr.mxu0 %v305
    %988 = vmatpush1.msra.mxu0 %v304
    %989 = vmatprep.subr.mxu0 %v309
    %990 = vmatpush1.msra.mxu0 %v308
    %991 = vmatprep.subr.mxu0 %v313
    %992 = vmatpush1.msra.mxu0 %v312
    %993 = vmatprep.subr.mxu0 %v317
    %994 = vmatpush1.msra.mxu0 %v316
    %995 = vmatprep.subr.mxu0 %v321
    %996 = vmatpush1.msra.mxu0 %v320
    %997 = vmatprep.subr.mxu0 %v325
    %998 = vmatpush1.msra.mxu0 %v324
    %999 = vmatprep.subr.mxu0 %v329
    %1000 = vmatpush1.msra.mxu0 %v328
    %1001 = vmatprep.subr.mxu0 %v333
    %1002 = vmatpush1.msra.mxu0 %v332
    %1003 = vmatprep.subr.mxu0 %v337
    %1004 = vmatpush1.msra.mxu0 %v336
    %1005 = vmatprep.subr.mxu0 %v341
    %1006 = vmatpush1.msra.mxu0 %v340
    %1007 = vmatprep.subr.mxu0 0.0
    %1008 = vmatpush1.msra.mxu0 0.0
    %1009 = vmatprep.subr.mxu0 0.0
    %1010 = vmatpush1.msra.mxu0 0.0
    %1011 = vmatprep.subr.mxu0 0.0
    %1012 = vmatpush1.msra.mxu0 0.0
    %1013 = vmatprep.subr.mxu0 0.0
    %1014 = vmatpush1.msra.mxu0 0.0
    %1015 = vmatprep.subr.mxu0 0.0
    %1016 = vmatpush1.msra.mxu0 0.0
    %1017 = vmatprep.subr.mxu0 0.0
    %1018 = vmatpush1.msra.mxu0 0.0
    %1019 = vmatprep.subr.mxu0 0.0
    %1020 = vmatpush1.msra.mxu0 0.0
    %1021 = vmatprep.subr.mxu0 0.0
    %1022 = vmatpush1.msra.mxu0 0.0
    %1023 = vmatprep.subr.mxu0 0.0
    %1024 = vmatpush1.msra.mxu0 0.0
    %1025 = vmatprep.subr.mxu0 0.0
    %1026 = vmatpush1.msra.mxu0 0.0
    %1027 = vmatprep.subr.mxu0 0.0
    %1028 = vmatpush1.msra.mxu0 0.0
    %1029 = vmatprep.subr.mxu0 0.0
    %1030 = vmatpush1.msra.mxu0 0.0
    %1031 = vmatprep.subr.mxu0 0.0
    %1032 = vmatpush1.msra.mxu0 0.0
    %1033 = vmatprep.subr.mxu0 0.0
    %1034 = vmatpush1.msra.mxu0 0.0
    %1035 = vmatprep.subr.mxu0 0.0
    %1036 = vmatpush1.msra.mxu0 0.0
    %1037 = vmatprep.subr.mxu0 0.0
    %1038 = vmatpush1.msra.mxu0 0.0
    %1039 = vmatprep.mubr.f32.mxu0 0.0
    %1040 = vmatmul.mubr.f32.gmra.mrb[0].mxu0 %v901
    %v1041 = vpop.f32.mrb[0].mxu0
    %v1042 = vadd.f32 %v357, %v1041
    %v1043 = vpop.f32.mrb[0].mxu0
    %v1044 = vadd.f32 %v361, %v1043
    %1045 = vdwg.mxu0
    %s1046 = scalar_lea.vmem [#allocation2], 3
    %v1047 = vld [vmem:[%s1046] ss:$8 sm:$0x7]
    %v1048 = vadd.f32 %v971, %v1047
    %v1049 = vxor.u32 %v1048, 2147483648
    %v1050 = vmul.f32 %v1049, 1.442695
    %v1051 = vpow.pop %v1050
    %v1052 = vadd.f32 %v1051, 1.0
    %v1053 = vrcp.pop %v1052
    %v1054 = vmul.f32 1.0, %v1053
    %v1056 = vlaneseq
    %v1057 = vshrl.u32 %v1056, 7
    %v1058 = vsub.s32 1, %v1057
    %v1059 = vrot.slane %v1047, %v1058
    %v1061 = vadd.f32 %v973, %v1059
    %v1062 = vxor.u32 %v1061, 2147483648
    %v1063 = vmul.f32 %v1062, 1.442695
    %v1064 = vpow.pop %v1063
    %v1065 = vadd.f32 %v1064, 1.0
    %v1066 = vrcp.pop %v1065
    %v1067 = vmul.f32 1.0, %v1066
    %v1068 = vlaneseq
    %v1069 = vshrl.u32 %v1068, 7
    %v1070 = vsub.s32 2, %v1069
    %v1071 = vrot.slane %v1047, %v1070
    %v1073 = vadd.f32 %v1042, %v1071
    %v1074 = vmul.f32 %v1054, %v1044
    %v1075 = vadd.f32 %v1073, %v1074
    %v1076 = vtanh.pop %v1075
    %v1077 = vsub.f32 1.0, %v1067
    %v1078 = vmul.f32 %v1077, %v1076
    %v1079 = vmul.f32 %v1067, %v901
    %v1080 = vadd.f32 %v1078, %v1079
    %v1081 = vmax.f32 %v1080, 0.0
    %v1082 = vadd.f32 %v903, %v1081
    %1083 = vmatprep.subr.mxu0 %v279
    %1084 = vmatpush1.msra.mxu0 %v278
    %1085 = vmatprep.subr.mxu0 %v283
    %1086 = vmatpush1.msra.mxu0 %v282
    %1087 = vmatprep.subr.mxu0 %v287
    %1088 = vmatpush1.msra.mxu0 %v286
    %1089 = vmatprep.subr.mxu0 %v291
    %1090 = vmatpush1.msra.mxu0 %v290
    %1091 = vmatprep.subr.mxu0 %v295
    %1092 = vmatpush1.msra.mxu0 %v294
    %1093 = vmatprep.subr.mxu0 %v299
    %1094 = vmatpush1.msra.mxu0 %v298
    %1095 = vmatprep.subr.mxu0 %v303
    %1096 = vmatpush1.msra.mxu0 %v302
    %1097 = vmatprep.subr.mxu0 %v307
    %1098 = vmatpush1.msra.mxu0 %v306
    %1099 = vmatprep.subr.mxu0 %v311
    %1100 = vmatpush1.msra.mxu0 %v310
    %1101 = vmatprep.subr.mxu0 %v315
    %1102 = vmatpush1.msra.mxu0 %v314
    %1103 = vmatprep.subr.mxu0 %v319
    %1104 = vmatpush1.msra.mxu0 %v318
    %1105 = vmatprep.subr.mxu0 %v323
    %1106 = vmatpush1.msra.mxu0 %v322
    %1107 = vmatprep.subr.mxu0 %v327
    %1108 = vmatpush1.msra.mxu0 %v326
    %1109 = vmatprep.subr.mxu0 %v331
    %1110 = vmatpush1.msra.mxu0 %v330
    %1111 = vmatprep.subr.mxu0 %v335
    %1112 = vmatpush1.msra.mxu0 %v334
    %1113 = vmatprep.subr.mxu0 %v339
    %1114 = vmatpush1.msra.mxu0 %v338
    %1115 = vmatprep.subr.mxu0 0.0
    %1116 = vmatpush1.msra.mxu0 0.0
    %1117 = vmatprep.subr.mxu0 0.0
    %1118 = vmatpush1.msra.mxu0 0.0
    %1119 = vmatprep.subr.mxu0 0.0
    %1120 = vmatpush1.msra.mxu0 0.0
    %1121 = vmatprep.subr.mxu0 0.0
    %1122 = vmatpush1.msra.mxu0 0.0
    %1123 = vmatprep.subr.mxu0 0.0
    %1124 = vmatpush1.msra.mxu0 0.0
    %1125 = vmatprep.subr.mxu0 0.0
    %1126 = vmatpush1.msra.mxu0 0.0
    %1127 = vmatprep.subr.mxu0 0.0
    %1128 = vmatpush1.msra.mxu0 0.0
    %1129 = vmatprep.subr.mxu0 0.0
    %1130 = vmatpush1.msra.mxu0 0.0
    %1131 = vmatprep.subr.mxu0 0.0
    %1132 = vmatpush1.msra.mxu0 0.0
    %1133 = vmatprep.subr.mxu0 0.0
    %1134 = vmatpush1.msra.mxu0 0.0
    %1135 = vmatprep.subr.mxu0 0.0
    %1136 = vmatpush1.msra.mxu0 0.0
    %1137 = vmatprep.subr.mxu0 0.0
    %1138 = vmatpush1.msra.mxu0 0.0
    %1139 = vmatprep.subr.mxu0 0.0
    %1140 = vmatpush1.msra.mxu0 0.0
    %1141 = vmatprep.subr.mxu0 0.0
    %1142 = vmatpush1.msra.mxu0 0.0
    %1143 = vmatprep.subr.mxu0 0.0
    %1144 = vmatpush1.msra.mxu0 0.0
    %1145 = vmatprep.subr.mxu0 0.0
    %1146 = vmatpush1.msra.mxu0 0.0
    %1147 = vmatprep.mubr.f32.mxu0 0.0
    %1148 = vmatmul.mubr.f32.gmra.mrb[0].mxu0 %v1080
    %v1149 = vpop.f32.mrb[0].mxu0
    %v1150 = vadd.f32 %v349, %v1149
    %v1151 = vpop.f32.mrb[0].mxu0
    %v1152 = vadd.f32 %v353, %v1151
    %1153 = vdwg.mxu0
    %1154 = vmatprep.subr.mxu0 %v281
    %1155 = vmatpush1.msra.mxu0 %v280
    %1156 = vmatprep.subr.mxu0 %v285
    %1157 = vmatpush1.msra.mxu0 %v284
    %1158 = vmatprep.subr.mxu0 %v289
    %1159 = vmatpush1.msra.mxu0 %v288
    %1160 = vmatprep.subr.mxu0 %v293
    %1161 = vmatpush1.msra.mxu0 %v292
    %1162 = vmatprep.subr.mxu0 %v297
    %1163 = vmatpush1.msra.mxu0 %v296
    %1164 = vmatprep.subr.mxu0 %v301
    %1165 = vmatpush1.msra.mxu0 %v300
    %1166 = vmatprep.subr.mxu0 %v305
    %1167 = vmatpush1.msra.mxu0 %v304
    %1168 = vmatprep.subr.mxu0 %v309
    %1169 = vmatpush1.msra.mxu0 %v308
    %1170 = vmatprep.subr.mxu0 %v313
    %1171 = vmatpush1.msra.mxu0 %v312
    %1172 = vmatprep.subr.mxu0 %v317
    %1173 = vmatpush1.msra.mxu0 %v316
    %1174 = vmatprep.subr.mxu0 %v321
    %1175 = vmatpush1.msra.mxu0 %v320
    %1176 = vmatprep.subr.mxu0 %v325
    %1177 = vmatpush1.msra.mxu0 %v324
    %1178 = vmatprep.subr.mxu0 %v329
    %1179 = vmatpush1.msra.mxu0 %v328
    %1180 = vmatprep.subr.mxu0 %v333
    %1181 = vmatpush1.msra.mxu0 %v332
    %1182 = vmatprep.subr.mxu0 %v337
    %1183 = vmatpush1.msra.mxu0 %v336
    %1184 = vmatprep.subr.mxu0 %v341
    %1185 = vmatpush1.msra.mxu0 %v340
    %1186 = vmatprep.subr.mxu0 0.0
    %1187 = vmatpush1.msra.mxu0 0.0
    %1188 = vmatprep.subr.mxu0 0.0
    %1189 = vmatpush1.msra.mxu0 0.0
    %1190 = vmatprep.subr.mxu0 0.0
    %1191 = vmatpush1.msra.mxu0 0.0
    %1192 = vmatprep.subr.mxu0 0.0
    %1193 = vmatpush1.msra.mxu0 0.0
    %1194 = vmatprep.subr.mxu0 0.0
    %1195 = vmatpush1.msra.mxu0 0.0
    %1196 = vmatprep.subr.mxu0 0.0
    %1197 = vmatpush1.msra.mxu0 0.0
    %1198 = vmatprep.subr.mxu0 0.0
    %1199 = vmatpush1.msra.mxu0 0.0
    %1200 = vmatprep.subr.mxu0 0.0
    %1201 = vmatpush1.msra.mxu0 0.0
    %1202 = vmatprep.subr.mxu0 0.0
    %1203 = vmatpush1.msra.mxu0 0.0
    %1204 = vmatprep.subr.mxu0 0.0
    %1205 = vmatpush1.msra.mxu0 0.0
    %1206 = vmatprep.subr.mxu0 0.0
    %1207 = vmatpush1.msra.mxu0 0.0
    %1208 = vmatprep.subr.mxu0 0.0
    %1209 = vmatpush1.msra.mxu0 0.0
    %1210 = vmatprep.subr.mxu0 0.0
    %1211 = vmatpush1.msra.mxu0 0.0
    %1212 = vmatprep.subr.mxu0 0.0
    %1213 = vmatpush1.msra.mxu0 0.0
    %1214 = vmatprep.subr.mxu0 0.0
    %1215 = vmatpush1.msra.mxu0 0.0
    %1216 = vmatprep.subr.mxu0 0.0
    %1217 = vmatpush1.msra.mxu0 0.0
    %1218 = vmatprep.mubr.f32.mxu0 0.0
    %1219 = vmatmul.mubr.f32.gmra.mrb[0].mxu0 %v1080
    %v1220 = vpop.f32.mrb[0].mxu0
    %v1221 = vadd.f32 %v357, %v1220
    %v1222 = vpop.f32.mrb[0].mxu0
    %v1223 = vadd.f32 %v361, %v1222
    %1224 = vdwg.mxu0
    %s1225 = scalar_lea.vmem [#allocation2], 4
    %v1226 = vld [vmem:[%s1225] ss:$8 sm:$0x7]
    %v1227 = vadd.f32 %v1150, %v1226
    %v1228 = vxor.u32 %v1227, 2147483648
    %v1229 = vmul.f32 %v1228, 1.442695
    %v1230 = vpow.pop %v1229
    %v1231 = vadd.f32 %v1230, 1.0
    %v1232 = vrcp.pop %v1231
    %v1233 = vmul.f32 1.0, %v1232
    %v1235 = vlaneseq
    %v1236 = vshrl.u32 %v1235, 7
    %v1237 = vsub.s32 1, %v1236
    %v1238 = vrot.slane %v1226, %v1237
    %v1240 = vadd.f32 %v1152, %v1238
    %v1241 = vxor.u32 %v1240, 2147483648
    %v1242 = vmul.f32 %v1241, 1.442695
    %v1243 = vpow.pop %v1242
    %v1244 = vadd.f32 %v1243, 1.0
    %v1245 = vrcp.pop %v1244
    %v1246 = vmul.f32 1.0, %v1245
    %v1247 = vlaneseq
    %v1248 = vshrl.u32 %v1247, 7
    %v1249 = vsub.s32 2, %v1248
    %v1250 = vrot.slane %v1226, %v1249
    %v1252 = vadd.f32 %v1221, %v1250
    %v1253 = vmul.f32 %v1233, %v1223
    %v1254 = vadd.f32 %v1252, %v1253
    %v1255 = vtanh.pop %v1254
    %v1256 = vsub.f32 1.0, %v1246
    %v1257 = vmul.f32 %v1256, %v1255
    %v1258 = vmul.f32 %v1246, %v1080
    %v1259 = vadd.f32 %v1257, %v1258
    %v1260 = vmax.f32 %v1259, 0.0
    %v1261 = vadd.f32 %v1082, %v1260
    %1262 = vmatprep.subr.mxu0 %v279
    %1263 = vmatpush1.msra.mxu0 %v278
    %1264 = vmatprep.subr.mxu0 %v283
    %1265 = vmatpush1.msra.mxu0 %v282
    %1266 = vmatprep.subr.mxu0 %v287
    %1267 = vmatpush1.msra.mxu0 %v286
    %1268 = vmatprep.subr.mxu0 %v291
    %1269 = vmatpush1.msra.mxu0 %v290
    %1270 = vmatprep.subr.mxu0 %v295
    %1271 = vmatpush1.msra.mxu0 %v294
    %1272 = vmatprep.subr.mxu0 %v299
    %1273 = vmatpush1.msra.mxu0 %v298
    %1274 = vmatprep.subr.mxu0 %v303
    %1275 = vmatpush1.msra.mxu0 %v302
    %1276 = vmatprep.subr.mxu0 %v307
    %1277 = vmatpush1.msra.mxu0 %v306
    %1278 = vmatprep.subr.mxu0 %v311
    %1279 = vmatpush1.msra.mxu0 %v310
    %1280 = vmatprep.subr.mxu0 %v315
    %1281 = vmatpush1.msra.mxu0 %v314
    %1282 = vmatprep.subr.mxu0 %v319
    %1283 = vmatpush1.msra.mxu0 %v318
    %1284 = vmatprep.subr.mxu0 %v323
    %1285 = vmatpush1.msra.mxu0 %v322
    %1286 = vmatprep.subr.mxu0 %v327
    %1287 = vmatpush1.msra.mxu0 %v326
    %1288 = vmatprep.subr.mxu0 %v331
    %1289 = vmatpush1.msra.mxu0 %v330
    %1290 = vmatprep.subr.mxu0 %v335
    %1291 = vmatpush1.msra.mxu0 %v334
    %1292 = vmatprep.subr.mxu0 %v339
    %1293 = vmatpush1.msra.mxu0 %v338
    %1294 = vmatprep.subr.mxu0 0.0
    %1295 = vmatpush1.msra.mxu0 0.0
    %1296 = vmatprep.subr.mxu0 0.0
    %1297 = vmatpush1.msra.mxu0 0.0
    %1298 = vmatprep.subr.mxu0 0.0
    %1299 = vmatpush1.msra.mxu0 0.0
    %1300 = vmatprep.subr.mxu0 0.0
    %1301 = vmatpush1.msra.mxu0 0.0
    %1302 = vmatprep.subr.mxu0 0.0
    %1303 = vmatpush1.msra.mxu0 0.0
    %1304 = vmatprep.subr.mxu0 0.0
    %1305 = vmatpush1.msra.mxu0 0.0
    %1306 = vmatprep.subr.mxu0 0.0
    %1307 = vmatpush1.msra.mxu0 0.0
    %1308 = vmatprep.subr.mxu0 0.0
    %1309 = vmatpush1.msra.mxu0 0.0
    %1310 = vmatprep.subr.mxu0 0.0
    %1311 = vmatpush1.msra.mxu0 0.0
    %1312 = vmatprep.subr.mxu0 0.0
    %1313 = vmatpush1.msra.mxu0 0.0
    %1314 = vmatprep.subr.mxu0 0.0
    %1315 = vmatpush1.msra.mxu0 0.0
    %1316 = vmatprep.subr.mxu0 0.0
    %1317 = vmatpush1.msra.mxu0 0.0
    %1318 = vmatprep.subr.mxu0 0.0
    %1319 = vmatpush1.msra.mxu0 0.0
    %1320 = vmatprep.subr.mxu0 0.0
    %1321 = vmatpush1.msra.mxu0 0.0
    %1322 = vmatprep.subr.mxu0 0.0
    %1323 = vmatpush1.msra.mxu0 0.0
    %1324 = vmatprep.subr.mxu0 0.0
    %1325 = vmatpush1.msra.mxu0 0.0
    %1326 = vmatprep.mubr.f32.mxu0 0.0
    %1327 = vmatmul.mubr.f32.gmra.mrb[0].mxu0 %v1259
    %v1328 = vpop.f32.mrb[0].mxu0
    %v1329 = vadd.f32 %v349, %v1328
    %v1330 = vpop.f32.mrb[0].mxu0
    %v1331 = vadd.f32 %v353, %v1330
    %1332 = vdwg.mxu0
    %1333 = vmatprep.subr.mxu0 %v281
    %1334 = vmatpush1.msra.mxu0 %v280
    %1335 = vmatprep.subr.mxu0 %v285
    %1336 = vmatpush1.msra.mxu0 %v284
    %1337 = vmatprep.subr.mxu0 %v289
    %1338 = vmatpush1.msra.mxu0 %v288
    %1339 = vmatprep.subr.mxu0 %v293
    %1340 = vmatpush1.msra.mxu0 %v292
    %1341 = vmatprep.subr.mxu0 %v297
    %1342 = vmatpush1.msra.mxu0 %v296
    %1343 = vmatprep.subr.mxu0 %v301
    %1344 = vmatpush1.msra.mxu0 %v300
    %1345 = vmatprep.subr.mxu0 %v305
    %1346 = vmatpush1.msra.mxu0 %v304
    %1347 = vmatprep.subr.mxu0 %v309
    %1348 = vmatpush1.msra.mxu0 %v308
    %1349 = vmatprep.subr.mxu0 %v313
    %1350 = vmatpush1.msra.mxu0 %v312
    %1351 = vmatprep.subr.mxu0 %v317
    %1352 = vmatpush1.msra.mxu0 %v316
    %1353 = vmatprep.subr.mxu0 %v321
    %1354 = vmatpush1.msra.mxu0 %v320
    %1355 = vmatprep.subr.mxu0 %v325
    %1356 = vmatpush1.msra.mxu0 %v324
    %1357 = vmatprep.subr.mxu0 %v329
    %1358 = vmatpush1.msra.mxu0 %v328
    %1359 = vmatprep.subr.mxu0 %v333
    %1360 = vmatpush1.msra.mxu0 %v332
    %1361 = vmatprep.subr.mxu0 %v337
    %1362 = vmatpush1.msra.mxu0 %v336
    %1363 = vmatprep.subr.mxu0 %v341
    %1364 = vmatpush1.msra.mxu0 %v340
    %1365 = vmatprep.subr.mxu0 0.0
    %1366 = vmatpush1.msra.mxu0 0.0
    %1367 = vmatprep.subr.mxu0 0.0
    %1368 = vmatpush1.msra.mxu0 0.0
    %1369 = vmatprep.subr.mxu0 0.0
    %1370 = vmatpush1.msra.mxu0 0.0
    %1371 = vmatprep.subr.mxu0 0.0
    %1372 = vmatpush1.msra.mxu0 0.0
    %1373 = vmatprep.subr.mxu0 0.0
    %1374 = vmatpush1.msra.mxu0 0.0
    %1375 = vmatprep.subr.mxu0 0.0
    %1376 = vmatpush1.msra.mxu0 0.0
    %1377 = vmatprep.subr.mxu0 0.0
    %1378 = vmatpush1.msra.mxu0 0.0
    %1379 = vmatprep.subr.mxu0 0.0
    %1380 = vmatpush1.msra.mxu0 0.0
    %1381 = vmatprep.subr.mxu0 0.0
    %1382 = vmatpush1.msra.mxu0 0.0
    %1383 = vmatprep.subr.mxu0 0.0
    %1384 = vmatpush1.msra.mxu0 0.0
    %1385 = vmatprep.subr.mxu0 0.0
    %1386 = vmatpush1.msra.mxu0 0.0
    %1387 = vmatprep.subr.mxu0 0.0
    %1388 = vmatpush1.msra.mxu0 0.0
    %1389 = vmatprep.subr.mxu0 0.0
    %1390 = vmatpush1.msra.mxu0 0.0
    %1391 = vmatprep.subr.mxu0 0.0
    %1392 = vmatpush1.msra.mxu0 0.0
    %1393 = vmatprep.subr.mxu0 0.0
    %1394 = vmatpush1.msra.mxu0 0.0
    %1395 = vmatprep.subr.mxu0 0.0
    %1396 = vmatpush1.msra.mxu0 0.0
    %1397 = vmatprep.mubr.f32.mxu0 0.0
    %1398 = vmatmul.mubr.f32.gmra.mrb[0].mxu0 %v1259
    %v1399 = vpop.f32.mrb[0].mxu0
    %v1400 = vadd.f32 %v357, %v1399
    %v1401 = vpop.f32.mrb[0].mxu0
    %v1402 = vadd.f32 %v361, %v1401
    %1403 = vdwg.mxu0
    %s1404 = scalar_lea.vmem [#allocation2], 5
    %v1405 = vld [vmem:[%s1404] ss:$8 sm:$0x7]
    %v1406 = vadd.f32 %v1329, %v1405
    %v1407 = vxor.u32 %v1406, 2147483648
    %v1408 = vmul.f32 %v1407, 1.442695
    %v1409 = vpow.pop %v1408
    %v1410 = vadd.f32 %v1409, 1.0
    %v1411 = vrcp.pop %v1410
    %v1412 = vmul.f32 1.0, %v1411
    %v1414 = vlaneseq
    %v1415 = vshrl.u32 %v1414, 7
    %v1416 = vsub.s32 1, %v1415
    %v1417 = vrot.slane %v1405, %v1416
    %v1419 = vadd.f32 %v1331, %v1417
    %v1420 = vxor.u32 %v1419, 2147483648
    %v1421 = vmul.f32 %v1420, 1.442695
    %v1422 = vpow.pop %v1421
    %v1423 = vadd.f32 %v1422, 1.0
    %v1424 = vrcp.pop %v1423
    %v1425 = vmul.f32 1.0, %v1424
    %v1426 = vlaneseq
    %v1427 = vshrl.u32 %v1426, 7
    %v1428 = vsub.s32 2, %v1427
    %v1429 = vrot.slane %v1405, %v1428
    %v1431 = vadd.f32 %v1400, %v1429
    %v1432 = vmul.f32 %v1412, %v1402
    %v1433 = vadd.f32 %v1431, %v1432
    %v1434 = vtanh.pop %v1433
    %v1435 = vsub.f32 1.0, %v1425
    %v1436 = vmul.f32 %v1435, %v1434
    %v1437 = vmul.f32 %v1425, %v1259
    %v1438 = vadd.f32 %v1436, %v1437
    %v1439 = vmax.f32 %v1438, 0.0
    %v1440 = vadd.f32 %v1261, %v1439
    %1441 = vmatprep.subr.mxu0 %v279
    %1442 = vmatpush1.msra.mxu0 %v278
    %1443 = vmatprep.subr.mxu0 %v283
    %1444 = vmatpush1.msra.mxu0 %v282
    %1445 = vmatprep.subr.mxu0 %v287
    %1446 = vmatpush1.msra.mxu0 %v286
    %1447 = vmatprep.subr.mxu0 %v291
    %1448 = vmatpush1.msra.mxu0 %v290
    %1449 = vmatprep.subr.mxu0 %v295
    %1450 = vmatpush1.msra.mxu0 %v294
    %1451 = vmatprep.subr.mxu0 %v299
    %1452 = vmatpush1.msra.mxu0 %v298
    %1453 = vmatprep.subr.mxu0 %v303
    %1454 = vmatpush1.msra.mxu0 %v302
    %1455 = vmatprep.subr.mxu0 %v307
    %1456 = vmatpush1.msra.mxu0 %v306
    %1457 = vmatprep.subr.mxu0 %v311
    %1458 = vmatpush1.msra.mxu0 %v310
    %1459 = vmatprep.subr.mxu0 %v315
    %1460 = vmatpush1.msra.mxu0 %v314
    %1461 = vmatprep.subr.mxu0 %v319
    %1462 = vmatpush1.msra.mxu0 %v318
    %1463 = vmatprep.subr.mxu0 %v323
    %1464 = vmatpush1.msra.mxu0 %v322
    %1465 = vmatprep.subr.mxu0 %v327
    %1466 = vmatpush1.msra.mxu0 %v326
    %1467 = vmatprep.subr.mxu0 %v331
    %1468 = vmatpush1.msra.mxu0 %v330
    %1469 = vmatprep.subr.mxu0 %v335
    %1470 = vmatpush1.msra.mxu0 %v334
    %1471 = vmatprep.subr.mxu0 %v339
    %1472 = vmatpush1.msra.mxu0 %v338
    %1473 = vmatprep.subr.mxu0 0.0
    %1474 = vmatpush1.msra.mxu0 0.0
    %1475 = vmatprep.subr.mxu0 0.0
    %1476 = vmatpush1.msra.mxu0 0.0
    %1477 = vmatprep.subr.mxu0 0.0
    %1478 = vmatpush1.msra.mxu0 0.0
    %1479 = vmatprep.subr.mxu0 0.0
    %1480 = vmatpush1.msra.mxu0 0.0
    %1481 = vmatprep.subr.mxu0 0.0
    %1482 = vmatpush1.msra.mxu0 0.0
    %1483 = vmatprep.subr.mxu0 0.0
    %1484 = vmatpush1.msra.mxu0 0.0
    %1485 = vmatprep.subr.mxu0 0.0
    %1486 = vmatpush1.msra.mxu0 0.0
    %1487 = vmatprep.subr.mxu0 0.0
    %1488 = vmatpush1.msra.mxu0 0.0
    %1489 = vmatprep.subr.mxu0 0.0
    %1490 = vmatpush1.msra.mxu0 0.0
    %1491 = vmatprep.subr.mxu0 0.0
    %1492 = vmatpush1.msra.mxu0 0.0
    %1493 = vmatprep.subr.mxu0 0.0
    %1494 = vmatpush1.msra.mxu0 0.0
    %1495 = vmatprep.subr.mxu0 0.0
    %1496 = vmatpush1.msra.mxu0 0.0
    %1497 = vmatprep.subr.mxu0 0.0
    %1498 = vmatpush1.msra.mxu0 0.0
    %1499 = vmatprep.subr.mxu0 0.0
    %1500 = vmatpush1.msra.mxu0 0.0
    %1501 = vmatprep.subr.mxu0 0.0
    %1502 = vmatpush1.msra.mxu0 0.0
    %1503 = vmatprep.subr.mxu0 0.0
    %1504 = vmatpush1.msra.mxu0 0.0
    %1505 = vmatprep.mubr.f32.mxu0 0.0
    %1506 = vmatmul.mubr.f32.gmra.mrb[0].mxu0 %v1438
    %v1507 = vpop.f32.mrb[0].mxu0
    %v1508 = vadd.f32 %v349, %v1507
    %v1509 = vpop.f32.mrb[0].mxu0
    %v1510 = vadd.f32 %v353, %v1509
    %1511 = vdwg.mxu0
    %1512 = vmatprep.subr.mxu0 %v281
    %1513 = vmatpush1.msra.mxu0 %v280
    %1514 = vmatprep.subr.mxu0 %v285
    %1515 = vmatpush1.msra.mxu0 %v284
    %1516 = vmatprep.subr.mxu0 %v289
    %1517 = vmatpush1.msra.mxu0 %v288
    %1518 = vmatprep.subr.mxu0 %v293
    %1519 = vmatpush1.msra.mxu0 %v292
    %1520 = vmatprep.subr.mxu0 %v297
    %1521 = vmatpush1.msra.mxu0 %v296
    %1522 = vmatprep.subr.mxu0 %v301
    %1523 = vmatpush1.msra.mxu0 %v300
    %1524 = vmatprep.subr.mxu0 %v305
    %1525 = vmatpush1.msra.mxu0 %v304
    %1526 = vmatprep.subr.mxu0 %v309
    %1527 = vmatpush1.msra.mxu0 %v308
    %1528 = vmatprep.subr.mxu0 %v313
    %1529 = vmatpush1.msra.mxu0 %v312
    %1530 = vmatprep.subr.mxu0 %v317
    %1531 = vmatpush1.msra.mxu0 %v316
    %1532 = vmatprep.subr.mxu0 %v321
    %1533 = vmatpush1.msra.mxu0 %v320
    %1534 = vmatprep.subr.mxu0 %v325
    %1535 = vmatpush1.msra.mxu0 %v324
    %1536 = vmatprep.subr.mxu0 %v329
    %1537 = vmatpush1.msra.mxu0 %v328
    %1538 = vmatprep.subr.mxu0 %v333
    %1539 = vmatpush1.msra.mxu0 %v332
    %1540 = vmatprep.subr.mxu0 %v337
    %1541 = vmatpush1.msra.mxu0 %v336
    %1542 = vmatprep.subr.mxu0 %v341
    %1543 = vmatpush1.msra.mxu0 %v340
    %1544 = vmatprep.subr.mxu0 0.0
    %1545 = vmatpush1.msra.mxu0 0.0
    %1546 = vmatprep.subr.mxu0 0.0
    %1547 = vmatpush1.msra.mxu0 0.0
    %1548 = vmatprep.subr.mxu0 0.0
    %1549 = vmatpush1.msra.mxu0 0.0
    %1550 = vmatprep.subr.mxu0 0.0
    %1551 = vmatpush1.msra.mxu0 0.0
    %1552 = vmatprep.subr.mxu0 0.0
    %1553 = vmatpush1.msra.mxu0 0.0
    %1554 = vmatprep.subr.mxu0 0.0
    %1555 = vmatpush1.msra.mxu0 0.0
    %1556 = vmatprep.subr.mxu0 0.0
    %1557 = vmatpush1.msra.mxu0 0.0
    %1558 = vmatprep.subr.mxu0 0.0
    %1559 = vmatpush1.msra.mxu0 0.0
    %1560 = vmatprep.subr.mxu0 0.0
    %1561 = vmatpush1.msra.mxu0 0.0
    %1562 = vmatprep.subr.mxu0 0.0
    %1563 = vmatpush1.msra.mxu0 0.0
    %1564 = vmatprep.subr.mxu0 0.0
    %1565 = vmatpush1.msra.mxu0 0.0
    %1566 = vmatprep.subr.mxu0 0.0
    %1567 = vmatpush1.msra.mxu0 0.0
    %1568 = vmatprep.subr.mxu0 0.0
    %1569 = vmatpush1.msra.mxu0 0.0
    %1570 = vmatprep.subr.mxu0 0.0
    %1571 = vmatpush1.msra.mxu0 0.0
    %1572 = vmatprep.subr.mxu0 0.0
    %1573 = vmatpush1.msra.mxu0 0.0
    %1574 = vmatprep.subr.mxu0 0.0
    %1575 = vmatpush1.msra.mxu0 0.0
    %1576 = vmatprep.mubr.f32.mxu0 0.0
    %1577 = vmatmul.mubr.f32.gmra.mrb[0].mxu0 %v1438
    %v1578 = vpop.f32.mrb[0].mxu0
    %v1579 = vadd.f32 %v357, %v1578
    %v1580 = vpop.f32.mrb[0].mxu0
    %v1581 = vadd.f32 %v361, %v1580
    %1582 = vdwg.mxu0
    %s1583 = scalar_lea.vmem [#allocation2], 6
    %v1584 = vld [vmem:[%s1583] ss:$8 sm:$0x7]
    %v1585 = vadd.f32 %v1508, %v1584
    %v1586 = vxor.u32 %v1585, 2147483648
    %v1587 = vmul.f32 %v1586, 1.442695
    %v1588 = vpow.pop %v1587
    %v1589 = vadd.f32 %v1588, 1.0
    %v1590 = vrcp.pop %v1589
    %v1591 = vmul.f32 1.0, %v1590
    %v1593 = vlaneseq
    %v1594 = vshrl.u32 %v1593, 7
    %v1595 = vsub.s32 1, %v1594
    %v1596 = vrot.slane %v1584, %v1595
    %v1598 = vadd.f32 %v1510, %v1596
    %v1599 = vxor.u32 %v1598, 2147483648
    %v1600 = vmul.f32 %v1599, 1.442695
    %v1601 = vpow.pop %v1600
    %v1602 = vadd.f32 %v1601, 1.0
    %v1603 = vrcp.pop %v1602
    %v1604 = vmul.f32 1.0, %v1603
    %v1605 = vlaneseq
    %v1606 = vshrl.u32 %v1605, 7
    %v1607 = vsub.s32 2, %v1606
    %v1608 = vrot.slane %v1584, %v1607
    %v1610 = vadd.f32 %v1579, %v1608
    %v1611 = vmul.f32 %v1591, %v1581
    %v1612 = vadd.f32 %v1610, %v1611
    %v1613 = vtanh.pop %v1612
    %v1614 = vsub.f32 1.0, %v1604
    %v1615 = vmul.f32 %v1614, %v1613
    %v1616 = vmul.f32 %v1604, %v1438
    %v1617 = vadd.f32 %v1615, %v1616
    %v1618 = vmax.f32 %v1617, 0.0
    %v1619 = vadd.f32 %v1440, %v1618
    %1620 = vmatprep.subr.mxu0 %v279
    %1621 = vmatpush1.msra.mxu0 %v278
    %1622 = vmatprep.subr.mxu0 %v283
    %1623 = vmatpush1.msra.mxu0 %v282
    %1624 = vmatprep.subr.mxu0 %v287
    %1625 = vmatpush1.msra.mxu0 %v286
    %1626 = vmatprep.subr.mxu0 %v291
    %1627 = vmatpush1.msra.mxu0 %v290
    %1628 = vmatprep.subr.mxu0 %v295
    %1629 = vmatpush1.msra.mxu0 %v294
    %1630 = vmatprep.subr.mxu0 %v299
    %1631 = vmatpush1.msra.mxu0 %v298
    %1632 = vmatprep.subr.mxu0 %v303
    %1633 = vmatpush1.msra.mxu0 %v302
    %1634 = vmatprep.subr.mxu0 %v307
    %1635 = vmatpush1.msra.mxu0 %v306
    %1636 = vmatprep.subr.mxu0 %v311
    %1637 = vmatpush1.msra.mxu0 %v310
    %1638 = vmatprep.subr.mxu0 %v315
    %1639 = vmatpush1.msra.mxu0 %v314
    %1640 = vmatprep.subr.mxu0 %v319
    %1641 = vmatpush1.msra.mxu0 %v318
    %1642 = vmatprep.subr.mxu0 %v323
    %1643 = vmatpush1.msra.mxu0 %v322
    %1644 = vmatprep.subr.mxu0 %v327
    %1645 = vmatpush1.msra.mxu0 %v326
    %1646 = vmatprep.subr.mxu0 %v331
    %1647 = vmatpush1.msra.mxu0 %v330
    %1648 = vmatprep.subr.mxu0 %v335
    %1649 = vmatpush1.msra.mxu0 %v334
    %1650 = vmatprep.subr.mxu0 %v339
    %1651 = vmatpush1.msra.mxu0 %v338
    %1652 = vmatprep.subr.mxu0 0.0
    %1653 = vmatpush1.msra.mxu0 0.0
    %1654 = vmatprep.subr.mxu0 0.0
    %1655 = vmatpush1.msra.mxu0 0.0
    %1656 = vmatprep.subr.mxu0 0.0
    %1657 = vmatpush1.msra.mxu0 0.0
    %1658 = vmatprep.subr.mxu0 0.0
    %1659 = vmatpush1.msra.mxu0 0.0
    %1660 = vmatprep.subr.mxu0 0.0
    %1661 = vmatpush1.msra.mxu0 0.0
    %1662 = vmatprep.subr.mxu0 0.0
    %1663 = vmatpush1.msra.mxu0 0.0
    %1664 = vmatprep.subr.mxu0 0.0
    %1665 = vmatpush1.msra.mxu0 0.0
    %1666 = vmatprep.subr.mxu0 0.0
    %1667 = vmatpush1.msra.mxu0 0.0
    %1668 = vmatprep.subr.mxu0 0.0
    %1669 = vmatpush1.msra.mxu0 0.0
    %1670 = vmatprep.subr.mxu0 0.0
    %1671 = vmatpush1.msra.mxu0 0.0
    %1672 = vmatprep.subr.mxu0 0.0
    %1673 = vmatpush1.msra.mxu0 0.0
    %1674 = vmatprep.subr.mxu0 0.0
    %1675 = vmatpush1.msra.mxu0 0.0
    %1676 = vmatprep.subr.mxu0 0.0
    %1677 = vmatpush1.msra.mxu0 0.0
    %1678 = vmatprep.subr.mxu0 0.0
    %1679 = vmatpush1.msra.mxu0 0.0
    %1680 = vmatprep.subr.mxu0 0.0
    %1681 = vmatpush1.msra.mxu0 0.0
    %1682 = vmatprep.subr.mxu0 0.0
    %1683 = vmatpush1.msra.mxu0 0.0
    %1684 = vmatprep.mubr.f32.mxu0 0.0
    %1685 = vmatmul.mubr.f32.gmra.mrb[0].mxu0 %v1617
    %v1686 = vpop.f32.mrb[0].mxu0
    %v1687 = vadd.f32 %v349, %v1686
    %v1688 = vpop.f32.mrb[0].mxu0
    %v1689 = vadd.f32 %v353, %v1688
    %1690 = vdwg.mxu0
    %1691 = vmatprep.subr.mxu0 %v281
    %1692 = vmatpush1.msra.mxu0 %v280
    %1693 = vmatprep.subr.mxu0 %v285
    %1694 = vmatpush1.msra.mxu0 %v284
    %1695 = vmatprep.subr.mxu0 %v289
    %1696 = vmatpush1.msra.mxu0 %v288
    %1697 = vmatprep.subr.mxu0 %v293
    %1698 = vmatpush1.msra.mxu0 %v292
    %1699 = vmatprep.subr.mxu0 %v297
    %1700 = vmatpush1.msra.mxu0 %v296
    %1701 = vmatprep.subr.mxu0 %v301
    %1702 = vmatpush1.msra.mxu0 %v300
    %1703 = vmatprep.subr.mxu0 %v305
    %1704 = vmatpush1.msra.mxu0 %v304
    %1705 = vmatprep.subr.mxu0 %v309
    %1706 = vmatpush1.msra.mxu0 %v308
    %1707 = vmatprep.subr.mxu0 %v313
    %1708 = vmatpush1.msra.mxu0 %v312
    %1709 = vmatprep.subr.mxu0 %v317
    %1710 = vmatpush1.msra.mxu0 %v316
    %1711 = vmatprep.subr.mxu0 %v321
    %1712 = vmatpush1.msra.mxu0 %v320
    %1713 = vmatprep.subr.mxu0 %v325
    %1714 = vmatpush1.msra.mxu0 %v324
    %1715 = vmatprep.subr.mxu0 %v329
    %1716 = vmatpush1.msra.mxu0 %v328
    %1717 = vmatprep.subr.mxu0 %v333
    %1718 = vmatpush1.msra.mxu0 %v332
    %1719 = vmatprep.subr.mxu0 %v337
    %1720 = vmatpush1.msra.mxu0 %v336
    %1721 = vmatprep.subr.mxu0 %v341
    %1722 = vmatpush1.msra.mxu0 %v340
    %1723 = vmatprep.subr.mxu0 0.0
    %1724 = vmatpush1.msra.mxu0 0.0
    %1725 = vmatprep.subr.mxu0 0.0
    %1726 = vmatpush1.msra.mxu0 0.0
    %1727 = vmatprep.subr.mxu0 0.0
    %1728 = vmatpush1.msra.mxu0 0.0
    %1729 = vmatprep.subr.mxu0 0.0
    %1730 = vmatpush1.msra.mxu0 0.0
    %1731 = vmatprep.subr.mxu0 0.0
    %1732 = vmatpush1.msra.mxu0 0.0
    %1733 = vmatprep.subr.mxu0 0.0
    %1734 = vmatpush1.msra.mxu0 0.0
    %1735 = vmatprep.subr.mxu0 0.0
    %1736 = vmatpush1.msra.mxu0 0.0
    %1737 = vmatprep.subr.mxu0 0.0
    %1738 = vmatpush1.msra.mxu0 0.0
    %1739 = vmatprep.subr.mxu0 0.0
    %1740 = vmatpush1.msra.mxu0 0.0
    %1741 = vmatprep.subr.mxu0 0.0
    %1742 = vmatpush1.msra.mxu0 0.0
    %1743 = vmatprep.subr.mxu0 0.0
    %1744 = vmatpush1.msra.mxu0 0.0
    %1745 = vmatprep.subr.mxu0 0.0
    %1746 = vmatpush1.msra.mxu0 0.0
    %1747 = vmatprep.subr.mxu0 0.0
    %1748 = vmatpush1.msra.mxu0 0.0
    %1749 = vmatprep.subr.mxu0 0.0
    %1750 = vmatpush1.msra.mxu0 0.0
    %1751 = vmatprep.subr.mxu0 0.0
    %1752 = vmatpush1.msra.mxu0 0.0
    %1753 = vmatprep.subr.mxu0 0.0
    %1754 = vmatpush1.msra.mxu0 0.0
    %1755 = vmatprep.mubr.f32.mxu0 0.0
    %1756 = vmatmul.mubr.f32.gmra.mrb[0].mxu0 %v1617
    %v1757 = vpop.f32.mrb[0].mxu0
    %v1758 = vadd.f32 %v357, %v1757
    %v1759 = vpop.f32.mrb[0].mxu0
    %v1760 = vadd.f32 %v361, %v1759
    %1761 = vdwg.mxu0
    %s1762 = scalar_lea.vmem [#allocation2], 7
    %v1763 = vld [vmem:[%s1762] ss:$8 sm:$0x7]
    %v1764 = vadd.f32 %v1687, %v1763
    %v1765 = vxor.u32 %v1764, 2147483648
    %v1766 = vmul.f32 %v1765, 1.442695
    %v1767 = vpow.pop %v1766
    %v1768 = vadd.f32 %v1767, 1.0
    %v1769 = vrcp.pop %v1768
    %v1770 = vmul.f32 1.0, %v1769
    %v1772 = vlaneseq
    %v1773 = vshrl.u32 %v1772, 7
    %v1774 = vsub.s32 1, %v1773
    %v1775 = vrot.slane %v1763, %v1774
    %v1777 = vadd.f32 %v1689, %v1775
    %v1778 = vxor.u32 %v1777, 2147483648
    %v1779 = vmul.f32 %v1778, 1.442695
    %v1780 = vpow.pop %v1779
    %v1781 = vadd.f32 %v1780, 1.0
    %v1782 = vrcp.pop %v1781
    %v1783 = vmul.f32 1.0, %v1782
    %v1784 = vlaneseq
    %v1785 = vshrl.u32 %v1784, 7
    %v1786 = vsub.s32 2, %v1785
    %v1787 = vrot.slane %v1763, %v1786
    %v1789 = vadd.f32 %v1758, %v1787
    %v1790 = vmul.f32 %v1770, %v1760
    %v1791 = vadd.f32 %v1789, %v1790
    %v1792 = vtanh.pop %v1791
    %v1793 = vsub.f32 1.0, %v1783
    %v1794 = vmul.f32 %v1793, %v1792
    %v1795 = vmul.f32 %v1783, %v1617
    %v1796 = vadd.f32 %v1794, %v1795
    %v1797 = vmax.f32 %v1796, 0.0
    %v1798 = vadd.f32 %v1619, %v1797
    %1799 = vmatprep.subr.mxu0 %v279
    %1800 = vmatpush1.msra.mxu0 %v278
    %1801 = vmatprep.subr.mxu0 %v283
    %1802 = vmatpush1.msra.mxu0 %v282
    %1803 = vmatprep.subr.mxu0 %v287
    %1804 = vmatpush1.msra.mxu0 %v286
    %1805 = vmatprep.subr.mxu0 %v291
    %1806 = vmatpush1.msra.mxu0 %v290
    %1807 = vmatprep.subr.mxu0 %v295
    %1808 = vmatpush1.msra.mxu0 %v294
    %1809 = vmatprep.subr.mxu0 %v299
    %1810 = vmatpush1.msra.mxu0 %v298
    %1811 = vmatprep.subr.mxu0 %v303
    %1812 = vmatpush1.msra.mxu0 %v302
    %1813 = vmatprep.subr.mxu0 %v307
    %1814 = vmatpush1.msra.mxu0 %v306
    %1815 = vmatprep.subr.mxu0 %v311
    %1816 = vmatpush1.msra.mxu0 %v310
    %1817 = vmatprep.subr.mxu0 %v315
    %1818 = vmatpush1.msra.mxu0 %v314
    %1819 = vmatprep.subr.mxu0 %v319
    %1820 = vmatpush1.msra.mxu0 %v318
    %1821 = vmatprep.subr.mxu0 %v323
    %1822 = vmatpush1.msra.mxu0 %v322
    %1823 = vmatprep.subr.mxu0 %v327
    %1824 = vmatpush1.msra.mxu0 %v326
    %1825 = vmatprep.subr.mxu0 %v331
    %1826 = vmatpush1.msra.mxu0 %v330
    %1827 = vmatprep.subr.mxu0 %v335
    %1828 = vmatpush1.msra.mxu0 %v334
    %1829 = vmatprep.subr.mxu0 %v339
    %1830 = vmatpush1.msra.mxu0 %v338
    %1831 = vmatprep.subr.mxu0 0.0
    %1832 = vmatpush1.msra.mxu0 0.0
    %1833 = vmatprep.subr.mxu0 0.0
    %1834 = vmatpush1.msra.mxu0 0.0
    %1835 = vmatprep.subr.mxu0 0.0
    %1836 = vmatpush1.msra.mxu0 0.0
    %1837 = vmatprep.subr.mxu0 0.0
    %1838 = vmatpush1.msra.mxu0 0.0
    %1839 = vmatprep.subr.mxu0 0.0
    %1840 = vmatpush1.msra.mxu0 0.0
    %1841 = vmatprep.subr.mxu0 0.0
    %1842 = vmatpush1.msra.mxu0 0.0
    %1843 = vmatprep.subr.mxu0 0.0
    %1844 = vmatpush1.msra.mxu0 0.0
    %1845 = vmatprep.subr.mxu0 0.0
    %1846 = vmatpush1.msra.mxu0 0.0
    %1847 = vmatprep.subr.mxu0 0.0
    %1848 = vmatpush1.msra.mxu0 0.0
    %1849 = vmatprep.subr.mxu0 0.0
    %1850 = vmatpush1.msra.mxu0 0.0
    %1851 = vmatprep.subr.mxu0 0.0
    %1852 = vmatpush1.msra.mxu0 0.0
    %1853 = vmatprep.subr.mxu0 0.0
    %1854 = vmatpush1.msra.mxu0 0.0
    %1855 = vmatprep.subr.mxu0 0.0
    %1856 = vmatpush1.msra.mxu0 0.0
    %1857 = vmatprep.subr.mxu0 0.0
    %1858 = vmatpush1.msra.mxu0 0.0
    %1859 = vmatprep.subr.mxu0 0.0
    %1860 = vmatpush1.msra.mxu0 0.0
    %1861 = vmatprep.subr.mxu0 0.0
    %1862 = vmatpush1.msra.mxu0 0.0
    %1863 = vmatprep.mubr.f32.mxu0 0.0
    %1864 = vmatmul.mubr.f32.gmra.mrb[0].mxu0 %v1796
    %v1865 = vpop.f32.mrb[0].mxu0
    %v1866 = vadd.f32 %v349, %v1865
    %v1867 = vpop.f32.mrb[0].mxu0
    %v1868 = vadd.f32 %v353, %v1867
    %1869 = vdwg.mxu0
    %1870 = vmatprep.subr.mxu0 %v281
    %1871 = vmatpush1.msra.mxu0 %v280
    %1872 = vmatprep.subr.mxu0 %v285
    %1873 = vmatpush1.msra.mxu0 %v284
    %1874 = vmatprep.subr.mxu0 %v289
    %1875 = vmatpush1.msra.mxu0 %v288
    %1876 = vmatprep.subr.mxu0 %v293
    %1877 = vmatpush1.msra.mxu0 %v292
    %1878 = vmatprep.subr.mxu0 %v297
    %1879 = vmatpush1.msra.mxu0 %v296
    %1880 = vmatprep.subr.mxu0 %v301
    %1881 = vmatpush1.msra.mxu0 %v300
    %1882 = vmatprep.subr.mxu0 %v305
    %1883 = vmatpush1.msra.mxu0 %v304
    %1884 = vmatprep.subr.mxu0 %v309
    %1885 = vmatpush1.msra.mxu0 %v308
    %1886 = vmatprep.subr.mxu0 %v313
    %1887 = vmatpush1.msra.mxu0 %v312
    %1888 = vmatprep.subr.mxu0 %v317
    %1889 = vmatpush1.msra.mxu0 %v316
    %1890 = vmatprep.subr.mxu0 %v321
    %1891 = vmatpush1.msra.mxu0 %v320
    %1892 = vmatprep.subr.mxu0 %v325
    %1893 = vmatpush1.msra.mxu0 %v324
    %1894 = vmatprep.subr.mxu0 %v329
    %1895 = vmatpush1.msra.mxu0 %v328
    %1896 = vmatprep.subr.mxu0 %v333
    %1897 = vmatpush1.msra.mxu0 %v332
    %1898 = vmatprep.subr.mxu0 %v337
    %1899 = vmatpush1.msra.mxu0 %v336
    %1900 = vmatprep.subr.mxu0 %v341
    %1901 = vmatpush1.msra.mxu0 %v340
    %1902 = vmatprep.subr.mxu0 0.0
    %1903 = vmatpush1.msra.mxu0 0.0
    %1904 = vmatprep.subr.mxu0 0.0
    %1905 = vmatpush1.msra.mxu0 0.0
    %1906 = vmatprep.subr.mxu0 0.0
    %1907 = vmatpush1.msra.mxu0 0.0
    %1908 = vmatprep.subr.mxu0 0.0
    %1909 = vmatpush1.msra.mxu0 0.0
    %1910 = vmatprep.subr.mxu0 0.0
    %1911 = vmatpush1.msra.mxu0 0.0
    %1912 = vmatprep.subr.mxu0 0.0
    %1913 = vmatpush1.msra.mxu0 0.0
    %1914 = vmatprep.subr.mxu0 0.0
    %1915 = vmatpush1.msra.mxu0 0.0
    %1916 = vmatprep.subr.mxu0 0.0
    %1917 = vmatpush1.msra.mxu0 0.0
    %1918 = vmatprep.subr.mxu0 0.0
    %1919 = vmatpush1.msra.mxu0 0.0
    %1920 = vmatprep.subr.mxu0 0.0
    %1921 = vmatpush1.msra.mxu0 0.0
    %1922 = vmatprep.subr.mxu0 0.0
    %1923 = vmatpush1.msra.mxu0 0.0
    %1924 = vmatprep.subr.mxu0 0.0
    %1925 = vmatpush1.msra.mxu0 0.0
    %1926 = vmatprep.subr.mxu0 0.0
    %1927 = vmatpush1.msra.mxu0 0.0
    %1928 = vmatprep.subr.mxu0 0.0
    %1929 = vmatpush1.msra.mxu0 0.0
    %1930 = vmatprep.subr.mxu0 0.0
    %1931 = vmatpush1.msra.mxu0 0.0
    %1932 = vmatprep.subr.mxu0 0.0
    %1933 = vmatpush1.msra.mxu0 0.0
    %1934 = vmatprep.mubr.f32.mxu0 0.0
    %1935 = vmatmul.mubr.f32.gmra.mrb[0].mxu0 %v1796
    %v1936 = vpop.f32.mrb[0].mxu0
    %v1937 = vadd.f32 %v357, %v1936
    %v1938 = vpop.f32.mrb[0].mxu0
    %v1939 = vadd.f32 %v361, %v1938
    %1940 = vdwg.mxu0
    %v1941 = vadd.f32 %v1866, %v1763
    %v1942 = vxor.u32 %v1941, 2147483648
    %v1943 = vmul.f32 %v1942, 1.442695
    %v1944 = vpow.pop %v1943
    %v1945 = vadd.f32 %v1944, 1.0
    %v1946 = vrcp.pop %v1945
    %v1947 = vmul.f32 1.0, %v1946
    %v1948 = vadd.f32 %v1868, %v1775
    %v1949 = vxor.u32 %v1948, 2147483648
    %v1950 = vmul.f32 %v1949, 1.442695
    %v1951 = vpow.pop %v1950
    %v1952 = vadd.f32 %v1951, 1.0
    %v1953 = vrcp.pop %v1952
    %v1954 = vmul.f32 1.0, %v1953
    %v1955 = vadd.f32 %v1937, %v1787
    %v1956 = vmul.f32 %v1947, %v1939
    %v1957 = vadd.f32 %v1955, %v1956
    %v1958 = vtanh.pop %v1957
    %v1959 = vsub.f32 1.0, %v1954
    %v1960 = vmul.f32 %v1959, %v1958
    %v1961 = vmul.f32 %v1954, %v1796
    %v1962 = vadd.f32 %v1960, %v1961
    %vm1963 = vcmp.ge.s32.totalorder %v344, 32
    %vm1964 = vcmp.lt.s32.totalorder %v344, 64
    %vm1965 = vmand %vm1963, %vm1964
    %v1966 = vsel %vm1965, %v1962, %v1796
    %v1967 = vmax.f32 %v1966, 0.0
    %v1968 = vadd.f32 %v1798, %v1967
    %v1969 = vld [vmem:[%s5] sm:$0x1]
    %v1970 = vmul.f32 %v1968, %v1969
    %vm1971 = vcmask 1040384
    %v1972 = vsel %vm1971, %v1970, 0.0
    %1973 = vadd.xlane.f32.xlu0 %v1972
    %v1974 = vpop.xlane.xlu0 %1973
    %v1975 = vld [vmem:[#allocation3] sm:$0x1]
    %v1976 = vmul.f32 %v1975, 8.0
    %v1977 = vadd.f32 %v1974, %v1976
    %vm1978 = vcmask 0
    %1979 = vst.msk [vmem:[#allocation10] sm:$0x1] %vm1978, %v1977
    // Predicated region
    $region42: #{tpu_custom_call.1} parent=1 // pred_check
      _
    $region43: #{tpu_custom_call.1} parent=1 // pred_check_branch
      %1981 = sbr.rel (0) target = $region45
    $region44: #{tpu_custom_call.1} parent=1 // pred_region
      %s1983 = ssub.s32 16, 16
      %1984 = vsyncadd [#allocation6], %s1983
      %s1986 = sshll.u32 [#allocation10], 4
      %s1987 = int_to_ptr.vmem [resolvable:$true] %s1986
      %1989 = dma.vmem_to_hbm [thread:$0]  %s1987, 16, %s7, [#allocation6]
    $region45: #{tpu_custom_call.1} parent=1 // pred_fallthru
      _
    // Predicated region
    $region46: #{tpu_custom_call.1} parent=1 // pred_check
      _
    $region47: #{tpu_custom_call.1} parent=1 // pred_check_branch
      %1991 = sbr.rel (0) target = $region49
    $region48: #{tpu_custom_call.1} parent=1 // pred_region
      %1992 = dma.done [#allocation6], 16
    $region49: #{tpu_custom_call.1} parent=1 // pred_fallthru
      _
    %1993 = vsyncpa [#allocation5], 1
    %1994 = vsyncpa [#allocation8], 1
    %1995 = vsyncpa [#allocation6], 1

</llo_original>
